<compile_context>
chip_gen: v5e
topology: v5e:2x2
jax: 0.10.0
libtpu: 0.0.40
codegen_flags: <defaults>
</compile_context>

<pallas_src>
import functools
import math

import jax
import jax.numpy as jnp
import numpy as np
from jax.experimental import pallas as pl
from jax.experimental.pallas import tpu as pltpu

LN_EPS = 1e-12


def _layer_norm(y, gamma, beta):
    mu = jnp.mean(y, axis=-1, keepdims=True)
    var = jnp.mean((y - mu) ** 2, axis=-1, keepdims=True)
    return (y - mu) * jax.lax.rsqrt(var + LN_EPS) * gamma + beta


def cross_layer_kernel(
    x_ref, cls_ref, mask_ref,
    wq_ref, wk_ref, wv_ref, wo_ref, w1_ref, w2_ref,
    vecd_ref, b1_ref,
    out_ref,
    k_scr, v_scr,
    *, n_head, head_dim, tq,
):
    qi = pl.program_id(1)
    L = x_ref.shape[1]
    D = n_head * head_dim

    vec = vecd_ref[...]                           # (9, D) packed f32 vectors
    bq, bk, bv, bo = vec[0:1], vec[1:2], vec[2:3], vec[3:4]
    g1, be1 = vec[4:5], vec[5:6]
    b2 = vec[6:7]
    g2, be2 = vec[7:8], vec[8:9]
    b1 = b1_ref[...]                              # (1, I) f32

    # ---- K / V projections: once per batch element, kept in bf16 VMEM scratch ----
    @pl.when(qi == 0)
    def _():
        xb = x_ref[0].astype(jnp.bfloat16)                                    # (L, D)
        k = jnp.dot(xb, wk_ref[...], preferred_element_type=jnp.float32) + bk
        v = jnp.dot(xb, wv_ref[...], preferred_element_type=jnp.float32) + bv
        k_scr[...] = k.astype(jnp.bfloat16)
        v_scr[...] = v.astype(jnp.bfloat16)

    # ---- current query tile ----
    row0 = pl.multiple_of(qi * tq, tq)
    xq = x_ref[0, pl.ds(row0, tq), :]             # (TQ, D) f32 (original rows, residual)
    cls = cls_ref[0]                              # (1, D)  f32
    mask = mask_ref[0]                            # (1, L)  additive key-position bias

    # q[:, 1:2, :] = query(cross_cls): replace (global) row 1 of x before the linear
    # projection — identical result, no extra matmul / full-tensor select on q.
    local_ids = jax.lax.broadcasted_iota(jnp.int32, (tq, 1), 0)
    xq_for_q = jnp.where(local_ids + row0 == 1, cls, xq)

    q = jnp.dot(xq_for_q.astype(jnp.bfloat16), wq_ref[...],
                preferred_element_type=jnp.float32) + bq                      # (TQ, D)

    qh = q.astype(jnp.bfloat16).reshape(tq, n_head, head_dim)
    kh = k_scr[...].reshape(L, n_head, head_dim)
    vh = v_scr[...].reshape(L, n_head, head_dim)

    scores = jnp.einsum("qhd,khd->hqk", qh, kh,
                        preferred_element_type=jnp.float32)                   # (H, TQ, L)
    scores = scores * (1.0 / math.sqrt(head_dim)) + mask[None, :, :]

    m = jnp.max(scores, axis=-1, keepdims=True)
    p = jnp.exp(scores - m)
    inv = pl.reciprocal(jnp.sum(p, axis=-1, keepdims=True), approx=True)
    probs = (p * inv).astype(jnp.bfloat16)                                    # bf16 for PV

    ctx = jnp.einsum("hqk,khd->qhd", probs, vh,
                     preferred_element_type=jnp.float32).reshape(tq, D)

    # ---- attention output projection + residual + LayerNorm (q_ln) ----
    attn_proj = jnp.dot(ctx.astype(jnp.bfloat16), wo_ref[...],
                        preferred_element_type=jnp.float32) + bo
    x1 = _layer_norm(xq + attn_proj, g1, be1)

    # ---- FFN (literal: BertIntermediate applies gelu, then act_fn applies it again) ----
    h = jnp.dot(x1.astype(jnp.bfloat16), w1_ref[...],
                preferred_element_type=jnp.float32) + b1
    h = jax.nn.gelu(h, approximate=True)   # tanh GELU (cheap on the single EUP slot)
    h = jax.nn.gelu(h, approximate=True)
    out_proj = jnp.dot(h.astype(jnp.bfloat16), w2_ref[...],
                       preferred_element_type=jnp.float32) + b2
    x2 = _layer_norm(x1 + out_proj, g2, be2)

    out_ref[0] = x2.astype(out_ref.dtype)


def cross_layer(x, attn_mask, cross_cls, params, n_head):
    B, L, D = x.shape
    I = params["w1"].shape[1]
    head_dim = D // n_head

    tq = L if L <= 128 else 128
    assert L % tq == 0, "sequence length must be a multiple of the query tile"
    # TODO(synk): pad/ragged handling for L not a multiple of 128.
    n_qt = L // tq

    x = x.astype(jnp.float32)
    mask3 = attn_mask.reshape(B, 1, L).astype(jnp.float32)
    cls3 = cross_cls.reshape(B, 1, D).astype(jnp.float32)

    # Weights feed the MXU in bf16; biases / LN vectors stay f32 and are packed.
    to_bf16 = lambda a: a.astype(jnp.bfloat16)
    wq, wk, wv, wo = map(to_bf16, (params["wq"], params["wk"], params["wv"], params["wo"]))
    w1, w2 = to_bf16(params["w1"]), to_bf16(params["w2"])
    vecd = jnp.concatenate(
        [params[n] for n in ("bq", "bk", "bv", "bo", "g1", "be1", "b2", "g2", "be2")],
        axis=0).astype(jnp.float32)                                  # (9, D)
    b1 = params["b1"].astype(jnp.float32)                            # (1, I)

    const = lambda b, q: (0, 0)
    in_specs = [
        pl.BlockSpec((1, L, D), lambda b, q: (b, 0, 0)),   # x (full sequence, per batch)
        pl.BlockSpec((1, 1, D), lambda b, q: (b, 0, 0)),   # cross_cls
        pl.BlockSpec((1, 1, L), lambda b, q: (b, 0, 0)),   # additive key mask
        pl.BlockSpec((D, D), const),                        # wq (bf16)
        pl.BlockSpec((D, D), const),                        # wk
        pl.BlockSpec((D, D), const),                        # wv
        pl.BlockSpec((D, D), const),                        # wo
        pl.BlockSpec((D, I), const),                        # w1
        pl.BlockSpec((I, D), const),                        # w2
        pl.BlockSpec((9, D), const),                        # packed bias / LN vectors
        pl.BlockSpec((1, I), const),                        # b1
    ]

    # Explicit scoped-VMEM budget: bf16 weights dominate the resident footprint; add
    # tile-level terms and a margin, clamp above defaults but below v7x's 64 MiB.
    weight_bytes = 2 * (4 * D * D + 2 * D * I)
    tile_bytes = 4 * (2 * L * D + 6 * tq * D + 2 * tq * I + 2 * n_head * tq * L)
    vmem_limit = int(min(max(2 * weight_bytes + 2 * tile_bytes + (8 << 20), 32 << 20),
                         56 << 20))

    kernel = functools.partial(cross_layer_kernel, n_head=n_head,
                               head_dim=head_dim, tq=tq)

    y = pl.pallas_call(
        kernel,
        out_shape=jax.ShapeDtypeStruct((B, L, D), jnp.float32),
        grid_spec=pltpu.PrefetchScalarGridSpec(
            num_scalar_prefetch=0,
            grid=(B, n_qt),
            in_specs=in_specs,
            out_specs=pl.BlockSpec((1, tq, D), lambda b, q: (b, q, 0)),
            scratch_shapes=[pltpu.VMEM((L, D), jnp.bfloat16),   # K cache (per batch)
                            pltpu.VMEM((L, D), jnp.bfloat16)],  # V cache (per batch)
        ),
        compiler_params=pltpu.CompilerParams(
            dimension_semantics=("parallel", "arbitrary"),
            vmem_limit_bytes=vmem_limit,
        ),
    )(x, cls3, mask3, wq, wk, wv, wo, w1, w2, vecd, b1)

    moe_loss = jnp.zeros((), dtype=x.dtype)   # non-MoE path: x.new_zeros(())
    return y, moe_loss


def ref_cross_layer(x, attn_mask, cross_cls, params, n_head):
    """Pure-JAX f32 reference (exact erf GELU) for correctness checking."""
    B, L, D = x.shape
    hd = D // n_head

    def lin(z, w, b):
        return z @ w + b

    q = lin(x, params["wq"], params["bq"])
    q_cross = lin(cross_cls, params["wq"], params["bq"])[:, None, :]
    q = q.at[:, 1:2, :].set(q_cross)
    k = lin(x, params["wk"], params["bk"])
    v = lin(x, params["wv"], params["bv"])

    def split(z):
        return z.reshape(B, L, n_head, hd).transpose(0, 2, 1, 3)

    qh, kh, vh = map(split, (q, k, v))
    scores = jnp.einsum("bhqd,bhkd->bhqk", qh, kh) / math.sqrt(hd)
    scores = scores + attn_mask[:, None, None, :]
    probs = jax.nn.softmax(scores, axis=-1)
    ctx = jnp.einsum("bhqk,bhkd->bhqd", probs, vh)
    ctx = ctx.transpose(0, 2, 1, 3).reshape(B, L, D)

    x1 = _layer_norm(x + lin(ctx, params["wo"], params["bo"]),
                     params["g1"], params["be1"])
    inter = jax.nn.gelu(lin(x1, params["w1"], params["b1"]), approximate=False)
    ffn = jax.nn.gelu(inter, approximate=False)
    x2 = _layer_norm(x1 + lin(ffn, params["w2"], params["b2"]),
                     params["g2"], params["be2"])
    return x2


def init_params(key, D, I):
    ks = jax.random.split(key, 12)
    s = 0.05
    return {
        "wq": jax.random.normal(ks[0], (D, D), jnp.float32) * s,
        "bq": jax.random.normal(ks[1], (1, D), jnp.float32) * s,
        "wk": jax.random.normal(ks[2], (D, D), jnp.float32) * s,
        "bk": jax.random.normal(ks[3], (1, D), jnp.float32) * s,
        "wv": jax.random.normal(ks[4], (D, D), jnp.float32) * s,
        "bv": jax.random.normal(ks[5], (1, D), jnp.float32) * s,
        "wo": jax.random.normal(ks[6], (D, D), jnp.float32) * s,
        "bo": jax.random.normal(ks[7], (1, D), jnp.float32) * s,
        "g1": jnp.ones((1, D), jnp.float32),
        "be1": jnp.zeros((1, D), jnp.float32),
        "w1": jax.random.normal(ks[8], (D, I), jnp.float32) * s,
        "b1": jax.random.normal(ks[9], (1, I), jnp.float32) * s,
        "w2": jax.random.normal(ks[10], (I, D), jnp.float32) * s,
        "b2": jax.random.normal(ks[11], (1, D), jnp.float32) * s,
        "g2": jnp.ones((1, D), jnp.float32),
        "be2": jnp.zeros((1, D), jnp.float32),
    }


if __name__ == "__main__":
    B, L, D, H, I = 2, 8, 32, 4, 64   # batch, seq, hidden, heads, intermediate

    key = jax.random.PRNGKey(0)
    kx, kc, kp = jax.random.split(key, 3)

    x = jax.random.normal(kx, (B, L, D), jnp.float32)
    cross_cls = jax.random.normal(kc, (B, D), jnp.float32)
    # additive key mask: batch 0 fully valid, batch 1 masks the last 2 positions
    mask = jnp.zeros((B, L), jnp.float32)
    mask = mask.at[1, L - 2:].set(-10000.0)

    params = init_params(kp, D, I)

    y, moe_loss = cross_layer(x, mask, cross_cls, params, n_head=H)
    y = jax.block_until_ready(y)

    y_ref = ref_cross_layer(x, mask, cross_cls, params, n_head=H)
    # bf16 MXU operands + tanh GELU + approx reciprocal drift slightly from the
    # f32/erf reference — well inside 2e-2.
    np.testing.assert_allclose(np.asarray(y), np.asarray(y_ref), rtol=2e-2, atol=2e-2)
    assert float(moe_loss) == 0.0
    print("KERNEL_OK")
</pallas_src>

<mosaic_0001>
module attributes {stable_mosaic.version = 11 : i64} {
  func.func @cross_layer_kernel(%arg0: i32, %arg1: i32, %arg2: memref<1x8x32xf32, #tpu.memory_space<vmem>>, %arg3: memref<1x1x32xf32, #tpu.memory_space<vmem>>, %arg4: memref<1x1x8xf32, #tpu.memory_space<vmem>>, %arg5: memref<32x32xbf16, #tpu.memory_space<vmem>>, %arg6: memref<32x32xbf16, #tpu.memory_space<vmem>>, %arg7: memref<32x32xbf16, #tpu.memory_space<vmem>>, %arg8: memref<32x32xbf16, #tpu.memory_space<vmem>>, %arg9: memref<32x64xbf16, #tpu.memory_space<vmem>>, %arg10: memref<64x32xbf16, #tpu.memory_space<vmem>>, %arg11: memref<9x32xf32, #tpu.memory_space<vmem>>, %arg12: memref<1x64xf32, #tpu.memory_space<vmem>>, %arg13: memref<1x8x32xf32, #tpu.memory_space<vmem>>, %arg14: memref<8x32xbf16, #tpu.memory_space<vmem>>, %arg15: memref<8x32xbf16, #tpu.memory_space<vmem>>) attributes {dimension_semantics = [#tpu.dimension_semantics<parallel>, #tpu.dimension_semantics<arbitrary>], iteration_bounds = array<i64: 2, 1>, scalar_prefetch = 0 : i64, scratch_operands = 2 : i64, tpu.core_type = #tpu.core_type<tc>, window_params = [{transform_indices = @transform_0, window_bounds = array<i64: 1, 8, 32>}, {transform_indices = @transform_1, window_bounds = array<i64: 1, 1, 32>}, {transform_indices = @transform_2, window_bounds = array<i64: 1, 1, 8>}, {pipeline_mode = #tpu.pipeline_mode<synchronous>, transform_indices = @transform_3, window_bounds = array<i64: 32, 32>}, {pipeline_mode = #tpu.pipeline_mode<synchronous>, transform_indices = @transform_4, window_bounds = array<i64: 32, 32>}, {pipeline_mode = #tpu.pipeline_mode<synchronous>, transform_indices = @transform_5, window_bounds = array<i64: 32, 32>}, {pipeline_mode = #tpu.pipeline_mode<synchronous>, transform_indices = @transform_6, window_bounds = array<i64: 32, 32>}, {pipeline_mode = #tpu.pipeline_mode<synchronous>, transform_indices = @transform_7, window_bounds = array<i64: 32, 64>}, {pipeline_mode = #tpu.pipeline_mode<synchronous>, transform_indices = @transform_8, window_bounds = array<i64: 64, 32>}, {pipeline_mode = #tpu.pipeline_mode<synchronous>, transform_indices = @transform_9, window_bounds = array<i64: 9, 32>}, {pipeline_mode = #tpu.pipeline_mode<synchronous>, transform_indices = @transform_10, window_bounds = array<i64: 1, 64>}, {transform_indices = @transform_11, window_bounds = array<i64: 1, 8, 32>}]} {
    %c0 = arith.constant 0 : index
    %c0_0 = arith.constant 0 : index
    %0 = vector.load %arg11[%c0, %c0_0] : memref<9x32xf32, #tpu.memory_space<vmem>>, vector<9x32xf32>
    %1 = vector.extract_strided_slice %0 {offsets = [0, 0], sizes = [1, 32], strides = [1, 1]} : vector<9x32xf32> to vector<1x32xf32>
    %2 = vector.extract_strided_slice %0 {offsets = [1, 0], sizes = [1, 32], strides = [1, 1]} : vector<9x32xf32> to vector<1x32xf32>
    %3 = vector.extract_strided_slice %0 {offsets = [2, 0], sizes = [1, 32], strides = [1, 1]} : vector<9x32xf32> to vector<1x32xf32>
    %4 = vector.extract_strided_slice %0 {offsets = [3, 0], sizes = [1, 32], strides = [1, 1]} : vector<9x32xf32> to vector<1x32xf32>
    %5 = vector.extract_strided_slice %0 {offsets = [4, 0], sizes = [1, 32], strides = [1, 1]} : vector<9x32xf32> to vector<1x32xf32>
    %6 = vector.extract_strided_slice %0 {offsets = [5, 0], sizes = [1, 32], strides = [1, 1]} : vector<9x32xf32> to vector<1x32xf32>
    %7 = vector.extract_strided_slice %0 {offsets = [6, 0], sizes = [1, 32], strides = [1, 1]} : vector<9x32xf32> to vector<1x32xf32>
    %8 = vector.extract_strided_slice %0 {offsets = [7, 0], sizes = [1, 32], strides = [1, 1]} : vector<9x32xf32> to vector<1x32xf32>
    %9 = vector.extract_strided_slice %0 {offsets = [8, 0], sizes = [1, 32], strides = [1, 1]} : vector<9x32xf32> to vector<1x32xf32>
    %c0_1 = arith.constant 0 : index
    %c0_2 = arith.constant 0 : index
    %10 = vector.load %arg12[%c0_1, %c0_2] : memref<1x64xf32, #tpu.memory_space<vmem>>, vector<1x64xf32>
    %c0_i32 = arith.constant 0 : i32
    %11 = arith.cmpi eq, %arg1, %c0_i32 : i32
    %12 = arith.extui %11 : i1 to i32
    %c0_i32_3 = arith.constant 0 : i32
    %13 = arith.cmpi ne, %12, %c0_i32_3 : i32
    scf.if %13 {
      %c0_53 = arith.constant 0 : index
      %c0_54 = arith.constant 0 : index
      %c0_55 = arith.constant 0 : index
      %154 = vector.load %arg2[%c0_53, %c0_54, %c0_55] : memref<1x8x32xf32, #tpu.memory_space<vmem>>, vector<1x8x32xf32>
      %155 = vector.shape_cast %154 : vector<1x8x32xf32> to vector<8x32xf32>
      %156 = arith.truncf %155 : vector<8x32xf32> to vector<8x32xbf16>
      %c0_56 = arith.constant 0 : index
      %c0_57 = arith.constant 0 : index
      %157 = vector.load %arg6[%c0_56, %c0_57] : memref<32x32xbf16, #tpu.memory_space<vmem>>, vector<32x32xbf16>
      %cst_58 = arith.constant dense<0.000000e+00> : vector<8x32xf32>
      %158 = tpu.matmul %156, %157, %cst_58 {dimension_numbers = #tpu.dot_dimension_numbers<[1], [0], [0], [1], [0, 0, 1, 1], [], []>} : vector<8x32xbf16>, vector<32x32xbf16>, vector<8x32xf32> -> vector<8x32xf32>
      %159 = vector.broadcast %2 : vector<1x32xf32> to vector<8x32xf32>
      %160 = arith.addf %158, %159 : vector<8x32xf32>
      %c0_59 = arith.constant 0 : index
      %c0_60 = arith.constant 0 : index
      %161 = vector.load %arg7[%c0_59, %c0_60] : memref<32x32xbf16, #tpu.memory_space<vmem>>, vector<32x32xbf16>
      %cst_61 = arith.constant dense<0.000000e+00> : vector<8x32xf32>
      %162 = tpu.matmul %156, %161, %cst_61 {dimension_numbers = #tpu.dot_dimension_numbers<[1], [0], [0], [1], [0, 0, 1, 1], [], []>} : vector<8x32xbf16>, vector<32x32xbf16>, vector<8x32xf32> -> vector<8x32xf32>
      %163 = vector.broadcast %3 : vector<1x32xf32> to vector<8x32xf32>
      %164 = arith.addf %162, %163 : vector<8x32xf32>
      %165 = arith.truncf %160 : vector<8x32xf32> to vector<8x32xbf16>
      %c0_62 = arith.constant 0 : index
      %c0_63 = arith.constant 0 : index
      %166 = vector.load %arg14[%c0_62, %c0_63] : memref<8x32xbf16, #tpu.memory_space<vmem>>, vector<8x32xbf16>
      tpu.vector_store %arg14[%c0_62, %c0_63], %165 {strides = array<i32>} : memref<8x32xbf16, #tpu.memory_space<vmem>>, vector<8x32xbf16>,
      %167 = arith.truncf %164 : vector<8x32xf32> to vector<8x32xbf16>
      %c0_64 = arith.constant 0 : index
      %c0_65 = arith.constant 0 : index
      %168 = vector.load %arg15[%c0_64, %c0_65] : memref<8x32xbf16, #tpu.memory_space<vmem>>, vector<8x32xbf16>
      tpu.vector_store %arg15[%c0_64, %c0_65], %167 {strides = array<i32>} : memref<8x32xbf16, #tpu.memory_space<vmem>>, vector<8x32xbf16>,
    } else {
    }
    %c8_i32 = arith.constant 8 : i32
    %14 = arith.muli %arg1, %c8_i32 : i32
    %15 = tpu.assume_multiple %14, 8 : i32
    %c0_4 = arith.constant 0 : index
    %16 = arith.index_cast %15 : i32 to index
    %c0_5 = arith.constant 0 : index
    %17 = vector.load %arg2[%c0_4, %16, %c0_5] : memref<1x8x32xf32, #tpu.memory_space<vmem>>, vector<1x8x32xf32>
    %18 = vector.shape_cast %17 : vector<1x8x32xf32> to vector<8x32xf32>
    %c0_6 = arith.constant 0 : index
    %c0_7 = arith.constant 0 : index
    %c0_8 = arith.constant 0 : index
    %19 = vector.load %arg3[%c0_6, %c0_7, %c0_8] : memref<1x1x32xf32, #tpu.memory_space<vmem>>, vector<1x1x32xf32>
    %20 = vector.shape_cast %19 : vector<1x1x32xf32> to vector<1x32xf32>
    %c0_9 = arith.constant 0 : index
    %c0_10 = arith.constant 0 : index
    %c0_11 = arith.constant 0 : index
    %21 = vector.load %arg4[%c0_9, %c0_10, %c0_11] : memref<1x1x8xf32, #tpu.memory_space<vmem>>, vector<1x1x8xf32>
    %22 = vector.shape_cast %21 : vector<1x1x8xf32> to vector<1x8xf32>
    %23 = tpu.iota {dimensions = array<i32: 0>} : vector<8x1xi32>
    %24 = vector.broadcast %15 : i32 to vector<8x1xi32>
    %25 = arith.addi %23, %24 : vector<8x1xi32>
    %c1_i32 = arith.constant 1 : i32
    %26 = vector.broadcast %c1_i32 : i32 to vector<8x1xi32>
    %27 = arith.cmpi eq, %25, %26 : vector<8x1xi32>
    %28 = vector.shape_cast %27 : vector<8x1xi1> to vector<8x1xi1>
    %29 = vector.broadcast %28 : vector<8x1xi1> to vector<8x32xi1>
    %30 = vector.shape_cast %20 : vector<1x32xf32> to vector<1x32xf32>
    %31 = vector.broadcast %30 : vector<1x32xf32> to vector<8x32xf32>
    %32 = arith.select %29, %31, %18 : vector<8x32xi1>, vector<8x32xf32>
    %33 = arith.truncf %32 : vector<8x32xf32> to vector<8x32xbf16>
    %c0_12 = arith.constant 0 : index
    %c0_13 = arith.constant 0 : index
    %34 = vector.load %arg5[%c0_12, %c0_13] : memref<32x32xbf16, #tpu.memory_space<vmem>>, vector<32x32xbf16>
    %cst = arith.constant dense<0.000000e+00> : vector<8x32xf32>
    %35 = tpu.matmul %33, %34, %cst {dimension_numbers = #tpu.dot_dimension_numbers<[1], [0], [0], [1], [0, 0, 1, 1], [], []>} : vector<8x32xbf16>, vector<32x32xbf16>, vector<8x32xf32> -> vector<8x32xf32>
    %36 = vector.broadcast %1 : vector<1x32xf32> to vector<8x32xf32>
    %37 = arith.addf %35, %36 : vector<8x32xf32>
    %38 = arith.truncf %37 : vector<8x32xf32> to vector<8x32xbf16>
    %39 = vector.shape_cast %38 : vector<8x32xbf16> to vector<8x4x8xbf16>
    %c0_14 = arith.constant 0 : index
    %c0_15 = arith.constant 0 : index
    %40 = vector.load %arg14[%c0_14, %c0_15] : memref<8x32xbf16, #tpu.memory_space<vmem>>, vector<8x32xbf16>
    %41 = vector.shape_cast %40 : vector<8x32xbf16> to vector<8x4x8xbf16>
    %c0_16 = arith.constant 0 : index
    %c0_17 = arith.constant 0 : index
    %42 = vector.load %arg15[%c0_16, %c0_17] : memref<8x32xbf16, #tpu.memory_space<vmem>>, vector<8x32xbf16>
    %43 = vector.shape_cast %42 : vector<8x32xbf16> to vector<8x4x8xbf16>
    "tpu.trace_start"() <{level = 10 : i32, message = "qhd,khd->hqk"}> : () -> ()
    %cst_18 = arith.constant dense<0.000000e+00> : vector<4x8x8xf32>
    %44 = tpu.matmul %39, %41, %cst_18 {dimension_numbers = #tpu.dot_dimension_numbers<[2], [2], [0], [0], [0, 1, 0, 0, 1, 0], [1], [1]>} : vector<8x4x8xbf16>, vector<8x4x8xbf16>, vector<4x8x8xf32> -> vector<4x8x8xf32>
    "tpu.trace_stop"() : () -> ()
    %cst_19 = arith.constant 0.353553385 : f32
    %45 = vector.broadcast %cst_19 : f32 to vector<4x8x8xf32>
    %46 = arith.mulf %44, %45 : vector<4x8x8xf32>
    %47 = vector.shape_cast %22 : vector<1x8xf32> to vector<1x1x8xf32>
    %48 = vector.broadcast %47 : vector<1x1x8xf32> to vector<4x8x8xf32>
    %49 = arith.addf %46, %48 : vector<4x8x8xf32>
    %cst_20 = arith.constant dense<0xFF800000> : vector<4x8xf32>
    %50 = vector.multi_reduction <maximumf>, %49, %cst_20 [2] : vector<4x8x8xf32> to vector<4x8xf32>
    %51 = vector.shape_cast %50 : vector<4x8xf32> to vector<4x8x1xf32>
    %52 = vector.broadcast %51 : vector<4x8x1xf32> to vector<4x8x8xf32>
    %53 = arith.subf %49, %52 : vector<4x8x8xf32>
    %54 = math.exp %53 : vector<4x8x8xf32>
    %cst_21 = arith.constant dense<0.000000e+00> : vector<4x8xf32>
    %55 = vector.multi_reduction <add>, %54, %cst_21 [2] : vector<4x8x8xf32> to vector<4x8xf32>
    %56 = vector.shape_cast %55 : vector<4x8xf32> to vector<4x8x1xf32>
    %57 = tpu.reciprocal %56 {approx = true} : vector<4x8x1xf32> -> vector<4x8x1xf32>
    %58 = vector.broadcast %57 : vector<4x8x1xf32> to vector<4x8x8xf32>
    %59 = arith.mulf %54, %58 : vector<4x8x8xf32>
    %60 = arith.truncf %59 : vector<4x8x8xf32> to vector<4x8x8xbf16>
    "tpu.trace_start"() <{level = 10 : i32, message = "hqk,khd->qhd"}> : () -> ()
    %cst_22 = arith.constant dense<0.000000e+00> : vector<4x8x8xf32>
    %61 = tpu.matmul %43, %60, %cst_22 {dimension_numbers = #tpu.dot_dimension_numbers<[0], [2], [2], [1], [0, 1, 0, 2, 1, 1], [1], [0]>} : vector<8x4x8xbf16>, vector<4x8x8xbf16>, vector<4x8x8xf32> -> vector<4x8x8xf32>
    %62 = tpu.transpose %61, [2, 0, 1] : vector<4x8x8xf32> -> vector<8x4x8xf32>
    "tpu.trace_stop"() : () -> ()
    %63 = vector.shape_cast %62 : vector<8x4x8xf32> to vector<8x32xf32>
    %64 = arith.truncf %63 : vector<8x32xf32> to vector<8x32xbf16>
    %c0_23 = arith.constant 0 : index
    %c0_24 = arith.constant 0 : index
    %65 = vector.load %arg8[%c0_23, %c0_24] : memref<32x32xbf16, #tpu.memory_space<vmem>>, vector<32x32xbf16>
    %cst_25 = arith.constant dense<0.000000e+00> : vector<8x32xf32>
    %66 = tpu.matmul %64, %65, %cst_25 {dimension_numbers = #tpu.dot_dimension_numbers<[1], [0], [0], [1], [0, 0, 1, 1], [], []>} : vector<8x32xbf16>, vector<32x32xbf16>, vector<8x32xf32> -> vector<8x32xf32>
    %67 = vector.broadcast %4 : vector<1x32xf32> to vector<8x32xf32>
    %68 = arith.addf %66, %67 : vector<8x32xf32>
    %69 = arith.addf %18, %68 : vector<8x32xf32>
    %cst_26 = arith.constant dense<0.000000e+00> : vector<8xf32>
    %70 = vector.multi_reduction <add>, %69, %cst_26 [1] : vector<8x32xf32> to vector<8xf32>
    %71 = vector.shape_cast %70 : vector<8xf32> to vector<8x1xf32>
    %cst_27 = arith.constant 3.200000e+01 : f32
    %72 = vector.broadcast %cst_27 : f32 to vector<8x1xf32>
    %73 = arith.divf %71, %72 : vector<8x1xf32>
    %74 = vector.broadcast %73 : vector<8x1xf32> to vector<8x32xf32>
    %75 = arith.subf %69, %74 : vector<8x32xf32>
    %76 = arith.mulf %75, %75 : vector<8x32xf32>
    %cst_28 = arith.constant dense<0.000000e+00> : vector<8xf32>
    %77 = vector.multi_reduction <add>, %76, %cst_28 [1] : vector<8x32xf32> to vector<8xf32>
    %78 = vector.shape_cast %77 : vector<8xf32> to vector<8x1xf32>
    %cst_29 = arith.constant 3.200000e+01 : f32
    %79 = vector.broadcast %cst_29 : f32 to vector<8x1xf32>
    %80 = arith.divf %78, %79 : vector<8x1xf32>
    %81 = vector.broadcast %73 : vector<8x1xf32> to vector<8x32xf32>
    %82 = arith.subf %69, %81 : vector<8x32xf32>
    %cst_30 = arith.constant 9.99999996E-13 : f32
    %83 = vector.broadcast %cst_30 : f32 to vector<8x1xf32>
    %84 = arith.addf %80, %83 : vector<8x1xf32>
    %85 = math.rsqrt %84 : vector<8x1xf32>
    %86 = vector.broadcast %85 : vector<8x1xf32> to vector<8x32xf32>
    %87 = arith.mulf %82, %86 : vector<8x32xf32>
    %88 = vector.broadcast %5 : vector<1x32xf32> to vector<8x32xf32>
    %89 = arith.mulf %87, %88 : vector<8x32xf32>
    %90 = vector.broadcast %6 : vector<1x32xf32> to vector<8x32xf32>
    %91 = arith.addf %89, %90 : vector<8x32xf32>
    %92 = arith.truncf %91 : vector<8x32xf32> to vector<8x32xbf16>
    %c0_31 = arith.constant 0 : index
    %c0_32 = arith.constant 0 : index
    %93 = vector.load %arg9[%c0_31, %c0_32] : memref<32x64xbf16, #tpu.memory_space<vmem>>, vector<32x64xbf16>
    %cst_33 = arith.constant dense<0.000000e+00> : vector<8x64xf32>
    %94 = tpu.matmul %92, %93, %cst_33 {dimension_numbers = #tpu.dot_dimension_numbers<[1], [0], [0], [1], [0, 0, 1, 1], [], []>} : vector<8x32xbf16>, vector<32x64xbf16>, vector<8x64xf32> -> vector<8x64xf32>
    %95 = vector.broadcast %10 : vector<1x64xf32> to vector<8x64xf32>
    %96 = arith.addf %94, %95 : vector<8x64xf32>
    %97 = arith.mulf %96, %96 : vector<8x64xf32>
    %98 = arith.mulf %96, %97 : vector<8x64xf32>
    %cst_34 = arith.constant 4.471500e-02 : f32
    %99 = vector.broadcast %cst_34 : f32 to vector<8x64xf32>
    %100 = arith.mulf %99, %98 : vector<8x64xf32>
    %101 = arith.addf %96, %100 : vector<8x64xf32>
    %cst_35 = arith.constant 0.797884583 : f32
    %102 = vector.broadcast %cst_35 : f32 to vector<8x64xf32>
    %103 = arith.mulf %102, %101 : vector<8x64xf32>
    %104 = math.tanh %103 : vector<8x64xf32>
    %cst_36 = arith.constant 1.000000e+00 : f32
    %105 = vector.broadcast %cst_36 : f32 to vector<8x64xf32>
    %106 = arith.addf %105, %104 : vector<8x64xf32>
    %cst_37 = arith.constant 5.000000e-01 : f32
    %107 = vector.broadcast %cst_37 : f32 to vector<8x64xf32>
    %108 = arith.mulf %107, %106 : vector<8x64xf32>
    %109 = arith.mulf %96, %108 : vector<8x64xf32>
    %110 = arith.mulf %109, %109 : vector<8x64xf32>
    %111 = arith.mulf %109, %110 : vector<8x64xf32>
    %cst_38 = arith.constant 4.471500e-02 : f32
    %112 = vector.broadcast %cst_38 : f32 to vector<8x64xf32>
    %113 = arith.mulf %112, %111 : vector<8x64xf32>
    %114 = arith.addf %109, %113 : vector<8x64xf32>
    %cst_39 = arith.constant 0.797884583 : f32
    %115 = vector.broadcast %cst_39 : f32 to vector<8x64xf32>
    %116 = arith.mulf %115, %114 : vector<8x64xf32>
    %117 = math.tanh %116 : vector<8x64xf32>
    %cst_40 = arith.constant 1.000000e+00 : f32
    %118 = vector.broadcast %cst_40 : f32 to vector<8x64xf32>
    %119 = arith.addf %118, %117 : vector<8x64xf32>
    %cst_41 = arith.constant 5.000000e-01 : f32
    %120 = vector.broadcast %cst_41 : f32 to vector<8x64xf32>
    %121 = arith.mulf %120, %119 : vector<8x64xf32>
    %122 = arith.mulf %109, %121 : vector<8x64xf32>
    %123 = arith.truncf %122 : vector<8x64xf32> to vector<8x64xbf16>
    %c0_42 = arith.constant 0 : index
    %c0_43 = arith.constant 0 : index
    %124 = vector.load %arg10[%c0_42, %c0_43] : memref<64x32xbf16, #tpu.memory_space<vmem>>, vector<64x32xbf16>
    %cst_44 = arith.constant dense<0.000000e+00> : vector<8x32xf32>
    %125 = tpu.matmul %123, %124, %cst_44 {dimension_numbers = #tpu.dot_dimension_numbers<[1], [0], [0], [1], [0, 0, 1, 1], [], []>} : vector<8x64xbf16>, vector<64x32xbf16>, vector<8x32xf32> -> vector<8x32xf32>
    %126 = vector.broadcast %7 : vector<1x32xf32> to vector<8x32xf32>
    %127 = arith.addf %125, %126 : vector<8x32xf32>
    %128 = arith.addf %91, %127 : vector<8x32xf32>
    %cst_45 = arith.constant dense<0.000000e+00> : vector<8xf32>
    %129 = vector.multi_reduction <add>, %128, %cst_45 [1] : vector<8x32xf32> to vector<8xf32>
    %130 = vector.shape_cast %129 : vector<8xf32> to vector<8x1xf32>
    %cst_46 = arith.constant 3.200000e+01 : f32
    %131 = vector.broadcast %cst_46 : f32 to vector<8x1xf32>
    %132 = arith.divf %130, %131 : vector<8x1xf32>
    %133 = vector.broadcast %132 : vector<8x1xf32> to vector<8x32xf32>
    %134 = arith.subf %128, %133 : vector<8x32xf32>
    %135 = arith.mulf %134, %134 : vector<8x32xf32>
    %cst_47 = arith.constant dense<0.000000e+00> : vector<8xf32>
    %136 = vector.multi_reduction <add>, %135, %cst_47 [1] : vector<8x32xf32> to vector<8xf32>
    %137 = vector.shape_cast %136 : vector<8xf32> to vector<8x1xf32>
    %cst_48 = arith.constant 3.200000e+01 : f32
    %138 = vector.broadcast %cst_48 : f32 to vector<8x1xf32>
    %139 = arith.divf %137, %138 : vector<8x1xf32>
    %140 = vector.broadcast %132 : vector<8x1xf32> to vector<8x32xf32>
    %141 = arith.subf %128, %140 : vector<8x32xf32>
    %cst_49 = arith.constant 9.99999996E-13 : f32
    %142 = vector.broadcast %cst_49 : f32 to vector<8x1xf32>
    %143 = arith.addf %139, %142 : vector<8x1xf32>
    %144 = math.rsqrt %143 : vector<8x1xf32>
    %145 = vector.broadcast %144 : vector<8x1xf32> to vector<8x32xf32>
    %146 = arith.mulf %141, %145 : vector<8x32xf32>
    %147 = vector.broadcast %8 : vector<1x32xf32> to vector<8x32xf32>
    %148 = arith.mulf %146, %147 : vector<8x32xf32>
    %149 = vector.broadcast %9 : vector<1x32xf32> to vector<8x32xf32>
    %150 = arith.addf %148, %149 : vector<8x32xf32>
    %c0_50 = arith.constant 0 : index
    %c0_51 = arith.constant 0 : index
    %c0_52 = arith.constant 0 : index
    %151 = vector.load %arg13[%c0_50, %c0_51, %c0_52] : memref<1x8x32xf32, #tpu.memory_space<vmem>>, vector<1x8x32xf32>
    %152 = vector.shape_cast %151 : vector<1x8x32xf32> to vector<8x32xf32>
    %153 = vector.shape_cast %150 : vector<8x32xf32> to vector<1x8x32xf32>
    tpu.vector_store %arg13[%c0_50, %c0_51, %c0_52], %153 {strides = array<i32>} : memref<1x8x32xf32, #tpu.memory_space<vmem>>, vector<1x8x32xf32>,
    return
  }
  func.func @transform_0(%arg0: i32, %arg1: i32) -> (i32, i32, i32) {
    %c0_i32 = arith.constant 0 : i32
    %c0_i32_0 = arith.constant 0 : i32
    %c0_i32_1 = arith.constant 0 : i32
    return %arg0, %c0_i32, %c0_i32_0 : i32, i32, i32
  }
  func.func @transform_1(%arg0: i32, %arg1: i32) -> (i32, i32, i32) {
    %c0_i32 = arith.constant 0 : i32
    %c0_i32_0 = arith.constant 0 : i32
    %c0_i32_1 = arith.constant 0 : i32
    return %arg0, %c0_i32, %c0_i32_0 : i32, i32, i32
  }
  func.func @transform_2(%arg0: i32, %arg1: i32) -> (i32, i32, i32) {
    %c0_i32 = arith.constant 0 : i32
    %c0_i32_0 = arith.constant 0 : i32
    %c0_i32_1 = arith.constant 0 : i32
    return %arg0, %c0_i32, %c0_i32_0 : i32, i32, i32
  }
  func.func @transform_3(%arg0: i32, %arg1: i32) -> (i32, i32) {
    %c0_i32 = arith.constant 0 : i32
    %c0_i32_0 = arith.constant 0 : i32
    %c0_i32_1 = arith.constant 0 : i32
    return %c0_i32, %c0_i32_0 : i32, i32
  }
  func.func @transform_4(%arg0: i32, %arg1: i32) -> (i32, i32) {
    %c0_i32 = arith.constant 0 : i32
    %c0_i32_0 = arith.constant 0 : i32
    %c0_i32_1 = arith.constant 0 : i32
    return %c0_i32, %c0_i32_0 : i32, i32
  }
  func.func @transform_5(%arg0: i32, %arg1: i32) -> (i32, i32) {
    %c0_i32 = arith.constant 0 : i32
    %c0_i32_0 = arith.constant 0 : i32
    %c0_i32_1 = arith.constant 0 : i32
    return %c0_i32, %c0_i32_0 : i32, i32
  }
  func.func @transform_6(%arg0: i32, %arg1: i32) -> (i32, i32) {
    %c0_i32 = arith.constant 0 : i32
    %c0_i32_0 = arith.constant 0 : i32
    %c0_i32_1 = arith.constant 0 : i32
    return %c0_i32, %c0_i32_0 : i32, i32
  }
  func.func @transform_7(%arg0: i32, %arg1: i32) -> (i32, i32) {
    %c0_i32 = arith.constant 0 : i32
    %c0_i32_0 = arith.constant 0 : i32
    %c0_i32_1 = arith.constant 0 : i32
    return %c0_i32, %c0_i32_0 : i32, i32
  }
  func.func @transform_8(%arg0: i32, %arg1: i32) -> (i32, i32) {
    %c0_i32 = arith.constant 0 : i32
    %c0_i32_0 = arith.constant 0 : i32
    %c0_i32_1 = arith.constant 0 : i32
    return %c0_i32, %c0_i32_0 : i32, i32
  }
  func.func @transform_9(%arg0: i32, %arg1: i32) -> (i32, i32) {
    %c0_i32 = arith.constant 0 : i32
    %c0_i32_0 = arith.constant 0 : i32
    %c0_i32_1 = arith.constant 0 : i32
    return %c0_i32, %c0_i32_0 : i32, i32
  }
  func.func @transform_10(%arg0: i32, %arg1: i32) -> (i32, i32) {
    %c0_i32 = arith.constant 0 : i32
    %c0_i32_0 = arith.constant 0 : i32
    %c0_i32_1 = arith.constant 0 : i32
    return %c0_i32, %c0_i32_0 : i32, i32
  }
  func.func @transform_11(%arg0: i32, %arg1: i32) -> (i32, i32, i32) {
    %c0_i32 = arith.constant 0 : i32
    %c0_i32_0 = arith.constant 0 : i32
    return %arg0, %arg1, %c0_i32 : i32, i32, i32
  }
}

</mosaic_0001>

<llo_original>
// kernel: tpu_custom_call.1
$region0: #{tpu_custom_call.1}
  #allocation0 [shape = 'u32[]', space=smem, size = 0x4, offset = 0x4, fixed_abs, tag = 'smem constant byte address 0x4 - core index']
  #allocation1 [shape = 'u32[72,128]{1,0:T(1,128)}', space=vmem, size = 0x9000, scoped, tag = 'internal scratch']
  #allocation2 [shape = 'bf16[8,32]{1,0:T(8,128)(2,1)}', space=vmem, size = 0x800, scoped, tag = 'scratch operand']
  #allocation3 [shape = 'bf16[8,32]{1,0:T(8,128)(2,1)}', space=vmem, size = 0x800, scoped, tag = 'scratch operand']
  %s0 = inlined_call_operand.vmem [shape: f32[2,8,32], index: 0, kind: input, shape index: {}]
  %s1 = inlined_call_operand.hbm [shape: f32[2,1,32], index: 1, kind: input, shape index: {}]
  %s2 = inlined_call_operand.hbm [shape: f32[2,1,8], index: 2, kind: input, shape index: {}]
  %s3 = inlined_call_operand.vmem [shape: bf16[32,32], index: 3, kind: input, shape index: {}]
  %s4 = inlined_call_operand.vmem [shape: bf16[32,32], index: 4, kind: input, shape index: {}]
  %s5 = inlined_call_operand.hbm [shape: bf16[32,32], index: 5, kind: input, shape index: {}]
  %s6 = inlined_call_operand.hbm [shape: bf16[32,32], index: 6, kind: input, shape index: {}]
  %s7 = inlined_call_operand.hbm [shape: bf16[32,64], index: 7, kind: input, shape index: {}]
  %s8 = inlined_call_operand.vmem [shape: bf16[64,32], index: 8, kind: input, shape index: {}]
  %s9 = inlined_call_operand.hbm [shape: f32[9,32], index: 9, kind: input, shape index: {}]
  %s10 = inlined_call_operand.vmem [shape: f32[1,64], index: 10, kind: input, shape index: {}]
  %s11 = inlined_call_operand.hbm [shape: f32[2,8,32], index: 11, kind: output, shape index: {}]
  %s12 = sld [smem:[#allocation0]]
  $region105: #{tpu_custom_call.1} parent=0
    _
  %s14 = ssub.s32 1, %s12
  %s15 = scalar_select 0, %s14, %s12
  $region1: #{tpu_custom_call.1} parent=0
    #allocation4 [shape = 'u8[1024]{0}', space=vmem, size = 0x400, scoped, tag = 'input window, operand 1']
    #allocation5 [shape = 's32[2]{0}', space=sflag, size = 0x8, scoped, tag = 'scoped memory for tpu_custom_call.1']
    #allocation6 [shape = 's32[2]{0}', space=sflag, size = 0x8, scoped, tag = 'scoped memory for tpu_custom_call.1']
    #allocation7 [shape = 'u8[1024]{0}', space=vmem, size = 0x400, scoped, tag = 'input window, operand 2']
    #allocation8 [shape = 's32[2]{0}', space=sflag, size = 0x8, scoped, tag = 'scoped memory for tpu_custom_call.1']
    #allocation9 [shape = 'u8[8192]{0}', space=vmem, size = 0x2000, scoped, tag = 'input window, operand 5, single buffered']
    #allocation10 [shape = 'u8[8192]{0}', space=vmem, size = 0x2000, scoped, tag = 'input window, operand 6, single buffered']
    #allocation11 [shape = 's32[1]{0}', space=sflag, size = 0x4, scoped, tag = 'scoped memory for tpu_custom_call.1']
    #allocation12 [shape = 'u8[8192]{0}', space=vmem, size = 0x2000, scoped, tag = 'input window, operand 7, single buffered']
    #allocation13 [shape = 'u8[8192]{0}', space=vmem, size = 0x2000, scoped, tag = 'input window, operand 9, single buffered']
    #allocation14 [shape = 's32[1]{0}', space=sflag, size = 0x4, scoped, tag = 'scoped memory for tpu_custom_call.1']
    #allocation15 [shape = 'u8[8192]{0}', space=vmem, size = 0x2000, scoped, tag = 'output window, operand 0']
    %16 = vsyncpa [#allocation5], 0
    %s17 = scalar_lea.sflag [#allocation5], 1
    %18 = vsyncpa %s17, 0
    %19 = vsyncpa [#allocation8], 0
    %s20 = scalar_lea.sflag [#allocation8], 1
    %21 = vsyncpa %s20, 0
    %22 = vsyncpa [#allocation11], 0
    %23 = vsyncpa [#allocation14], 0
    %24 = vsyncpa [#allocation6], 0
    %s25 = scalar_lea.sflag [#allocation6], 1
    %26 = vsyncpa %s25, 0
    loop: start=0, step=1, limit=4
    $region2: #{tpu_custom_call.1} parent=1 // loop_pre_header
      _
    $region3: #{tpu_custom_call.1} parent=1 // loop_header
      %s28 = sphi 0, %s32
      %p29 = scmp.ge.s32.totalorder %s28, 4
      %s35 = sphi 0, %s47
      %s36 = sphi 0, %s43
      %s37 = sphi 0, %s35
      %s38 = sphi 0, %s36
      %s39 = sphi 0, %s37
      %s40 = sphi 0, %s38
      %s50 = sphi 0, %s52
      %s53 = sphi 0, %s50
      %s54 = sphi 0, %s53
      %s70 = sphi 0, %s54
      %s76 = sphi 0, %s78
      %s79 = sphi 0, %s76
      %s80 = sphi 0, %s79
      %s96 = sphi 0, %s80
      %s102 = sphi 0, %s104
      %s105 = sphi 0, %s102
      %s106 = sphi 0, %s105
      %s122 = sphi 0, %s106
      %s126 = sphi 0, %s126
      %s128 = sphi 0, %s126
      %s129 = sphi 0, %s128
      %s143 = sphi 0, %s129
      %s147 = sphi 0, %s147
      %s149 = sphi 0, %s147
      %s150 = sphi 0, %s149
      %s164 = sphi 0, %s150
      %s168 = sphi 0, %s168
      %s170 = sphi 0, %s168
      %s171 = sphi 0, %s170
      %s185 = sphi 0, %s171
      %s189 = sphi 0, %s189
      %s191 = sphi 0, %s189
      %s192 = sphi 0, %s191
      %s206 = sphi 0, %s192
      %s210 = sphi 0, %s210
      %s212 = sphi 0, %s210
      %s213 = sphi 0, %s212
      %s227 = sphi 0, %s213
      %s231 = sphi 0, %s231
      %s233 = sphi 0, %s231
      %s234 = sphi 0, %s233
      %s248 = sphi 0, %s234
      %s252 = sphi 0, %s252
      %s254 = sphi 0, %s252
      %s255 = sphi 0, %s254
      %s269 = sphi 0, %s255
      %s273 = sphi 0, %s273
      %s275 = sphi 0, %s273
      %s276 = sphi 0, %s275
      %s290 = sphi 0, %s276
      %s298 = sphi 0, %s300
      %s301 = sphi 0, %s298
      %s302 = sphi 0, %s301
      %s318 = sphi 0, %s302
    $region4: #{tpu_custom_call.1} parent=1 // loop_header_branch
      %31 = sbr.rel (%p29) target = $region8
    $region5: #{tpu_custom_call.1} parent=1 // loop_body
      %s33 = ssub.s32 %s28, 1
      %s34 = ssub.s32 %s28, 2
      %s41 = sadd.s32 1, %s36
      %p42 = scmp.ge.s32.totalorder %s41, 1
      %s43 = scalar_select %p42, 0, %s41
      %s44 = sadd.s32 1, %s35
      %s45 = scalar_select %p42, %s44, %s35
      %p46 = scmp.ge.s32.totalorder %s45, 2
      %s47 = scalar_select %p46, 0, %s45
      %s48 = ssub.s32 %s35, %s47
      %p49 = scmp.eq.s32.totalorder %s48, 0
      %s51 = sadd.s32 %s50, 1
      %s52 = scalar_select %p49, %s50, %s51
      %p55 = pneg %p49
      %p56 = scmp.eq.s32.totalorder %s28, 1
      %p57 = por %p55, %p56
      %p58 = scmp.ne.s32.totalorder %s50, %s53
      %p59 = scmp.eq.s32.totalorder %s28, 0
      %p60 = por %p58, %p59
      %p61 = scmp.ne.s32.totalorder %s50, %s53
      %p62 = scmp.eq.s32.totalorder %s33, 1
      %p63 = por %p61, %p62
      %p64 = scmp.ne.s32.totalorder %s53, %s54
      %p65 = scmp.eq.s32.totalorder %s33, 0
      %p66 = por %p64, %p65
      %p67 = scmp.ne.s32.totalorder %s53, %s54
      %p68 = scmp.eq.s32.totalorder %s34, 1
      %p69 = por %p67, %p68
      %p71 = scmp.ne.s32.totalorder %s54, %s70
      %p72 = scmp.eq.s32.totalorder %s34, 0
      %p73 = por %p71, %p72
      %s74 = ssub.s32 %s35, %s47
      %p75 = scmp.eq.s32.totalorder %s74, 0
      %s77 = sadd.s32 %s76, 1
      %s78 = scalar_select %p75, %s76, %s77
      %p81 = pneg %p75
      %p82 = scmp.eq.s32.totalorder %s28, 1
      %p83 = por %p81, %p82
      %p84 = scmp.ne.s32.totalorder %s76, %s79
      %p85 = scmp.eq.s32.totalorder %s28, 0
      %p86 = por %p84, %p85
      %p87 = scmp.ne.s32.totalorder %s76, %s79
      %p88 = scmp.eq.s32.totalorder %s33, 1
      %p89 = por %p87, %p88
      %p90 = scmp.ne.s32.totalorder %s79, %s80
      %p91 = scmp.eq.s32.totalorder %s33, 0
      %p92 = por %p90, %p91
      %p93 = scmp.ne.s32.totalorder %s79, %s80
      %p94 = scmp.eq.s32.totalorder %s34, 1
      %p95 = por %p93, %p94
      %p97 = scmp.ne.s32.totalorder %s80, %s96
      %p98 = scmp.eq.s32.totalorder %s34, 0
      %p99 = por %p97, %p98
      %s100 = ssub.s32 %s35, %s47
      %p101 = scmp.eq.s32.totalorder %s100, 0
      %s103 = sadd.s32 %s102, 1
      %s104 = scalar_select %p101, %s102, %s103
      %p107 = pneg %p101
      %p108 = scmp.eq.s32.totalorder %s28, 1
      %p109 = por %p107, %p108
      %p110 = scmp.ne.s32.totalorder %s102, %s105
      %p111 = scmp.eq.s32.totalorder %s28, 0
      %p112 = por %p110, %p111
      %p113 = scmp.ne.s32.totalorder %s102, %s105
      %p114 = scmp.eq.s32.totalorder %s33, 1
      %p115 = por %p113, %p114
      %p116 = scmp.ne.s32.totalorder %s105, %s106
      %p117 = scmp.eq.s32.totalorder %s33, 0
      %p118 = por %p116, %p117
      %p119 = scmp.ne.s32.totalorder %s105, %s106
      %p120 = scmp.eq.s32.totalorder %s34, 1
      %p121 = por %p119, %p120
      %p123 = scmp.ne.s32.totalorder %s106, %s122
      %p124 = scmp.eq.s32.totalorder %s34, 0
      %p125 = por %p123, %p124
      %s127 = sadd.s32 %s126, 1
      %p130 = scmp.eq.s32.totalorder %s28, 1
      %p131 = scmp.ne.s32.totalorder %s126, %s128
      %p132 = scmp.eq.s32.totalorder %s28, 0
      %p133 = por %p131, %p132
      %p134 = scmp.ne.s32.totalorder %s126, %s128
      %p135 = scmp.eq.s32.totalorder %s33, 1
      %p136 = por %p134, %p135
      %p137 = scmp.ne.s32.totalorder %s128, %s129
      %p138 = scmp.eq.s32.totalorder %s33, 0
      %p139 = por %p137, %p138
      %p140 = scmp.ne.s32.totalorder %s128, %s129
      %p141 = scmp.eq.s32.totalorder %s34, 1
      %p142 = por %p140, %p141
      %p144 = scmp.ne.s32.totalorder %s129, %s143
      %p145 = scmp.eq.s32.totalorder %s34, 0
      %p146 = por %p144, %p145
      %s148 = sadd.s32 %s147, 1
      %p151 = scmp.eq.s32.totalorder %s28, 1
      %p152 = scmp.ne.s32.totalorder %s147, %s149
      %p153 = scmp.eq.s32.totalorder %s28, 0
      %p154 = por %p152, %p153
      %p155 = scmp.ne.s32.totalorder %s147, %s149
      %p156 = scmp.eq.s32.totalorder %s33, 1
      %p157 = por %p155, %p156
      %p158 = scmp.ne.s32.totalorder %s149, %s150
      %p159 = scmp.eq.s32.totalorder %s33, 0
      %p160 = por %p158, %p159
      %p161 = scmp.ne.s32.totalorder %s149, %s150
      %p162 = scmp.eq.s32.totalorder %s34, 1
      %p163 = por %p161, %p162
      %p165 = scmp.ne.s32.totalorder %s150, %s164
      %p166 = scmp.eq.s32.totalorder %s34, 0
      %p167 = por %p165, %p166
      %s169 = sadd.s32 %s168, 1
      %p172 = scmp.eq.s32.totalorder %s28, 1
      %p173 = scmp.ne.s32.totalorder %s168, %s170
      %p174 = scmp.eq.s32.totalorder %s28, 0
      %p175 = por %p173, %p174
      %p176 = scmp.ne.s32.totalorder %s168, %s170
      %p177 = scmp.eq.s32.totalorder %s33, 1
      %p178 = por %p176, %p177
      %p179 = scmp.ne.s32.totalorder %s170, %s171
      %p180 = scmp.eq.s32.totalorder %s33, 0
      %p181 = por %p179, %p180
      %p182 = scmp.ne.s32.totalorder %s170, %s171
      %p183 = scmp.eq.s32.totalorder %s34, 1
      %p184 = por %p182, %p183
      %p186 = scmp.ne.s32.totalorder %s171, %s185
      %p187 = scmp.eq.s32.totalorder %s34, 0
      %p188 = por %p186, %p187
      %s190 = sadd.s32 %s189, 1
      %p193 = scmp.eq.s32.totalorder %s28, 1
      %p194 = scmp.ne.s32.totalorder %s189, %s191
      %p195 = scmp.eq.s32.totalorder %s28, 0
      %p196 = por %p194, %p195
      %p197 = scmp.ne.s32.totalorder %s189, %s191
      %p198 = scmp.eq.s32.totalorder %s33, 1
      %p199 = por %p197, %p198
      %p200 = scmp.ne.s32.totalorder %s191, %s192
      %p201 = scmp.eq.s32.totalorder %s33, 0
      %p202 = por %p200, %p201
      %p203 = scmp.ne.s32.totalorder %s191, %s192
      %p204 = scmp.eq.s32.totalorder %s34, 1
      %p205 = por %p203, %p204
      %p207 = scmp.ne.s32.totalorder %s192, %s206
      %p208 = scmp.eq.s32.totalorder %s34, 0
      %p209 = por %p207, %p208
      %s211 = sadd.s32 %s210, 1
      %p214 = scmp.eq.s32.totalorder %s28, 1
      %p215 = scmp.ne.s32.totalorder %s210, %s212
      %p216 = scmp.eq.s32.totalorder %s28, 0
      %p217 = por %p215, %p216
      %p218 = scmp.ne.s32.totalorder %s210, %s212
      %p219 = scmp.eq.s32.totalorder %s33, 1
      %p220 = por %p218, %p219
      %p221 = scmp.ne.s32.totalorder %s212, %s213
      %p222 = scmp.eq.s32.totalorder %s33, 0
      %p223 = por %p221, %p222
      %p224 = scmp.ne.s32.totalorder %s212, %s213
      %p225 = scmp.eq.s32.totalorder %s34, 1
      %p226 = por %p224, %p225
      %p228 = scmp.ne.s32.totalorder %s213, %s227
      %p229 = scmp.eq.s32.totalorder %s34, 0
      %p230 = por %p228, %p229
      %s232 = sadd.s32 %s231, 1
      %p235 = scmp.eq.s32.totalorder %s28, 1
      %p236 = scmp.ne.s32.totalorder %s231, %s233
      %p237 = scmp.eq.s32.totalorder %s28, 0
      %p238 = por %p236, %p237
      %p239 = scmp.ne.s32.totalorder %s231, %s233
      %p240 = scmp.eq.s32.totalorder %s33, 1
      %p241 = por %p239, %p240
      %p242 = scmp.ne.s32.totalorder %s233, %s234
      %p243 = scmp.eq.s32.totalorder %s33, 0
      %p244 = por %p242, %p243
      %p245 = scmp.ne.s32.totalorder %s233, %s234
      %p246 = scmp.eq.s32.totalorder %s34, 1
      %p247 = por %p245, %p246
      %p249 = scmp.ne.s32.totalorder %s234, %s248
      %p250 = scmp.eq.s32.totalorder %s34, 0
      %p251 = por %p249, %p250
      %s253 = sadd.s32 %s252, 1
      %p256 = scmp.eq.s32.totalorder %s28, 1
      %p257 = scmp.ne.s32.totalorder %s252, %s254
      %p258 = scmp.eq.s32.totalorder %s28, 0
      %p259 = por %p257, %p258
      %p260 = scmp.ne.s32.totalorder %s252, %s254
      %p261 = scmp.eq.s32.totalorder %s33, 1
      %p262 = por %p260, %p261
      %p263 = scmp.ne.s32.totalorder %s254, %s255
      %p264 = scmp.eq.s32.totalorder %s33, 0
      %p265 = por %p263, %p264
      %p266 = scmp.ne.s32.totalorder %s254, %s255
      %p267 = scmp.eq.s32.totalorder %s34, 1
      %p268 = por %p266, %p267
      %p270 = scmp.ne.s32.totalorder %s255, %s269
      %p271 = scmp.eq.s32.totalorder %s34, 0
      %p272 = por %p270, %p271
      %s274 = sadd.s32 %s273, 1
      %p277 = scmp.eq.s32.totalorder %s28, 1
      %p278 = scmp.ne.s32.totalorder %s273, %s275
      %p279 = scmp.eq.s32.totalorder %s28, 0
      %p280 = por %p278, %p279
      %p281 = scmp.ne.s32.totalorder %s273, %s275
      %p282 = scmp.eq.s32.totalorder %s33, 1
      %p283 = por %p281, %p282
      %p284 = scmp.ne.s32.totalorder %s275, %s276
      %p285 = scmp.eq.s32.totalorder %s33, 0
      %p286 = por %p284, %p285
      %p287 = scmp.ne.s32.totalorder %s275, %s276
      %p288 = scmp.eq.s32.totalorder %s34, 1
      %p289 = por %p287, %p288
      %p291 = scmp.ne.s32.totalorder %s276, %s290
      %p292 = scmp.eq.s32.totalorder %s34, 0
      %p293 = por %p291, %p292
      %s294 = ssub.s32 %s35, %s47
      %s295 = ssub.s32 %s36, %s43
      %s296 = sor.u32 %s294, %s295
      %p297 = scmp.eq.s32.totalorder %s296, 0
      %s299 = sadd.s32 %s298, 1
      %s300 = scalar_select %p297, %s298, %s299
      %p303 = pneg %p297
      %p304 = scmp.eq.s32.totalorder %s28, 1
      %p305 = por %p303, %p304
      %p306 = scmp.ne.s32.totalorder %s298, %s301
      %p307 = scmp.eq.s32.totalorder %s28, 0
      %p308 = por %p306, %p307
      %p309 = scmp.ne.s32.totalorder %s298, %s301
      %p310 = scmp.eq.s32.totalorder %s33, 1
      %p311 = por %p309, %p310
      %p312 = scmp.ne.s32.totalorder %s301, %s302
      %p313 = scmp.eq.s32.totalorder %s33, 0
      %p314 = por %p312, %p313
      %p315 = scmp.ne.s32.totalorder %s301, %s302
      %p316 = scmp.eq.s32.totalorder %s34, 1
      %p317 = por %p315, %p316
      %p319 = scmp.ne.s32.totalorder %s302, %s318
      %p320 = scmp.eq.s32.totalorder %s34, 0
      %p321 = por %p319, %p320
      %p322 = scmp.le.s32.totalorder 1, %s28
      %p323 = scmp.lt.s32.totalorder %s28, 3
      %p324 = pnand %p322, %p323
      %p325 = pneg %p324
      // Predicated region
      $region9: #{tpu_custom_call.1} parent=5 // pred_check
        _
      $region10: #{tpu_custom_call.1} parent=5 // pred_check_branch
        %327 = sbr.rel (%p324) target = $region12
      $region11: #{tpu_custom_call.1} parent=5 // pred_region
        %s328 = ssub.s32 %s28, 1
        // Predicated region
        $region13: #{tpu_custom_call.1} parent=11 // pred_check
          %p329 = pneg %p139
        $region14: #{tpu_custom_call.1} parent=11 // pred_check_branch
          %331 = sbr.rel (%p329) target = $region16
        $region15: #{tpu_custom_call.1} parent=11 // pred_region
          _
        $region16: #{tpu_custom_call.1} parent=11 // pred_fallthru
          _
        // Predicated region
        $region17: #{tpu_custom_call.1} parent=11 // pred_check
          %p332 = pneg %p160
        $region18: #{tpu_custom_call.1} parent=11 // pred_check_branch
          %334 = sbr.rel (%p332) target = $region20
        $region19: #{tpu_custom_call.1} parent=11 // pred_region
          _
        $region20: #{tpu_custom_call.1} parent=11 // pred_fallthru
          _
        // Predicated region
        $region21: #{tpu_custom_call.1} parent=11 // pred_check
          %p335 = pneg %p181
        $region22: #{tpu_custom_call.1} parent=11 // pred_check_branch
          %337 = sbr.rel (%p335) target = $region24
        $region23: #{tpu_custom_call.1} parent=11 // pred_region
          %339 = vsyncadd [#allocation8], 0
          %s340 = sshll.u32 %s5, 4
          %s341 = int_to_ptr.hbm [resolvable:$true] %s340
          %s342 = sshll.u32 [#allocation9], 4
          %s343 = int_to_ptr.vmem [resolvable:$true] %s342
          %348 = dma.hbm_to_vmem [thread:$0]  %s341, 256, %s343, [#allocation8], 64, 64, 4
        $region24: #{tpu_custom_call.1} parent=11 // pred_fallthru
          _
        // Predicated region
        $region25: #{tpu_custom_call.1} parent=11 // pred_check
          %p349 = pneg %p202
        $region26: #{tpu_custom_call.1} parent=11 // pred_check_branch
          %351 = sbr.rel (%p349) target = $region28
        $region27: #{tpu_custom_call.1} parent=11 // pred_region
          %353 = vsyncadd [#allocation11], 0
          %s354 = sshll.u32 %s6, 4
          %s355 = int_to_ptr.hbm [resolvable:$true] %s354
          %s356 = sshll.u32 [#allocation10], 4
          %s357 = int_to_ptr.vmem [resolvable:$true] %s356
          %362 = dma.hbm_to_vmem [thread:$0]  %s355, 256, %s357, [#allocation11], 64, 64, 4
        $region28: #{tpu_custom_call.1} parent=11 // pred_fallthru
          _
        // Predicated region
        $region29: #{tpu_custom_call.1} parent=11 // pred_check
          %p363 = pneg %p223
        $region30: #{tpu_custom_call.1} parent=11 // pred_check_branch
          %365 = sbr.rel (%p363) target = $region32
        $region31: #{tpu_custom_call.1} parent=11 // pred_region
          %367 = vsyncadd [#allocation11], 0
          %s368 = sshll.u32 %s7, 4
          %s369 = int_to_ptr.hbm [resolvable:$true] %s368
          %s370 = sshll.u32 [#allocation12], 4
          %s371 = int_to_ptr.vmem [resolvable:$true] %s370
          %376 = dma.hbm_to_vmem [thread:$0]  %s369, 256, %s371, [#allocation11], 64, 64, 4
        $region32: #{tpu_custom_call.1} parent=11 // pred_fallthru
          _
        // Predicated region
        $region33: #{tpu_custom_call.1} parent=11 // pred_check
          %p377 = pneg %p244
        $region34: #{tpu_custom_call.1} parent=11 // pred_check_branch
          %379 = sbr.rel (%p377) target = $region36
        $region35: #{tpu_custom_call.1} parent=11 // pred_region
          _
        $region36: #{tpu_custom_call.1} parent=11 // pred_fallthru
          _
        // Predicated region
        $region37: #{tpu_custom_call.1} parent=11 // pred_check
          %p380 = pneg %p265
        $region38: #{tpu_custom_call.1} parent=11 // pred_check_branch
          %382 = sbr.rel (%p380) target = $region40
        $region39: #{tpu_custom_call.1} parent=11 // pred_region
          %384 = vsyncadd [#allocation14], 0
          %s385 = sshll.u32 %s9, 4
          %s386 = int_to_ptr.hbm [resolvable:$true] %s385
          %s387 = sshll.u32 [#allocation13], 4
          %s388 = int_to_ptr.vmem [resolvable:$true] %s387
          %393 = dma.hbm_to_vmem [thread:$0]  %s386, 256, %s388, [#allocation14], 128, 128, 8
        $region40: #{tpu_custom_call.1} parent=11 // pred_fallthru
          _
        // Predicated region
        $region41: #{tpu_custom_call.1} parent=11 // pred_check
          %p394 = pneg %p286
        $region42: #{tpu_custom_call.1} parent=11 // pred_check_branch
          %396 = sbr.rel (%p394) target = $region44
        $region43: #{tpu_custom_call.1} parent=11 // pred_region
          _
        $region44: #{tpu_custom_call.1} parent=11 // pred_fallthru
          _
      $region12: #{tpu_custom_call.1} parent=5 // pred_fallthru
        _
      %p397 = scmp.lt.s32.totalorder %s28, 2
      // Predicated region
      $region45: #{tpu_custom_call.1} parent=5 // pred_check
        %p398 = pneg %p397
      $region46: #{tpu_custom_call.1} parent=5 // pred_check_branch
        %400 = sbr.rel (%p398) target = $region48
      $region47: #{tpu_custom_call.1} parent=5 // pred_region
        // Predicated region
        $region49: #{tpu_custom_call.1} parent=47 // pred_check
          %p401 = pneg %p60
        $region50: #{tpu_custom_call.1} parent=47 // pred_check_branch
          %403 = sbr.rel (%p401) target = $region52
        $region51: #{tpu_custom_call.1} parent=47 // pred_region
          %p404 = scmp.lt.s32.totalorder %s35, 1
          %s405 = scalar_select %p404, %s35, 1
          %s406 = smul.addr %s405, 8
          %s407 = scalar_lea.vmem %s0, %s406
        $region52: #{tpu_custom_call.1} parent=47 // pred_fallthru
          _
        // Predicated region
        $region53: #{tpu_custom_call.1} parent=47 // pred_check
          %p408 = pneg %p86
        $region54: #{tpu_custom_call.1} parent=47 // pred_check_branch
          %410 = sbr.rel (%p408) target = $region56
        $region55: #{tpu_custom_call.1} parent=47 // pred_region
          %s411 = sand.u32 %s76, 1
          %s412 = scalar_lea.sflag [#allocation5], %s411
          %s413 = sand.u32 %s76, 1
          %s414 = scalar_lea.vmem [#allocation4], %s413
          %416 = vsyncadd %s412, 0
          %s417 = scalar_lea.hbm %s1, %s35
          %s419 = sshll.u32 %s417, 4
          %s420 = int_to_ptr.hbm [resolvable:$true] %s419
          %s421 = sshll.u32 %s414, 4
          %s422 = int_to_ptr.vmem [resolvable:$true] %s421
          %424 = dma.hbm_to_vmem [thread:$0]  %s420, 16, %s422, %s412
        $region56: #{tpu_custom_call.1} parent=47 // pred_fallthru
          _
        // Predicated region
        $region57: #{tpu_custom_call.1} parent=47 // pred_check
          %p425 = pneg %p112
        $region58: #{tpu_custom_call.1} parent=47 // pred_check_branch
          %427 = sbr.rel (%p425) target = $region60
        $region59: #{tpu_custom_call.1} parent=47 // pred_region
          %s428 = sand.u32 %s28, 1
          %s429 = scalar_lea.sflag [#allocation8], %s428
          %s430 = sand.u32 %s102, 1
          %s431 = scalar_lea.vmem [#allocation7], %s430
          %433 = vsyncadd %s429, 0
          %s434 = scalar_lea.hbm %s2, %s35
          %s436 = sshll.u32 %s434, 4
          %s437 = int_to_ptr.hbm [resolvable:$true] %s436
          %s438 = sshll.u32 %s431, 4
          %s439 = int_to_ptr.vmem [resolvable:$true] %s438
          %441 = dma.hbm_to_vmem [thread:$0]  %s437, 16, %s439, %s429
        $region60: #{tpu_custom_call.1} parent=47 // pred_fallthru
          _
      $region48: #{tpu_custom_call.1} parent=5 // pred_fallthru
        _
      %p442 = scmp.le.s32.totalorder 1, %s28
      %p443 = scmp.lt.s32.totalorder %s28, 3
      %p444 = pnand %p442, %p443
      %p445 = pneg %p444
      // Predicated region
      $region61: #{tpu_custom_call.1} parent=5 // pred_check
        _
      $region62: #{tpu_custom_call.1} parent=5 // pred_check_branch
        %447 = sbr.rel (%p444) target = $region64
      $region63: #{tpu_custom_call.1} parent=5 // pred_region
        %s448 = ssub.s32 %s28, 1
        %s449 = sand.u32 %s79, 1
        %s450 = scalar_lea.sflag [#allocation5], %s449
        %s451 = sand.u32 %s79, 1
        %s452 = scalar_lea.vmem [#allocation4], %s451
        // Predicated region
        $region65: #{tpu_custom_call.1} parent=63 // pred_check
          %p453 = pneg %p92
        $region66: #{tpu_custom_call.1} parent=63 // pred_check_branch
          %455 = sbr.rel (%p453) target = $region68
        $region67: #{tpu_custom_call.1} parent=63 // pred_region
          %457 = dma.done %s450, 16
        $region68: #{tpu_custom_call.1} parent=63 // pred_fallthru
          _
        %s458 = sand.u32 %s33, 1
        %s459 = scalar_lea.sflag [#allocation8], %s458
        %s460 = sand.u32 %s105, 1
        %s461 = scalar_lea.vmem [#allocation7], %s460
        // Predicated region
        $region69: #{tpu_custom_call.1} parent=63 // pred_check
          %p462 = pneg %p118
        $region70: #{tpu_custom_call.1} parent=63 // pred_check_branch
          %464 = sbr.rel (%p462) target = $region72
        $region71: #{tpu_custom_call.1} parent=63 // pred_region
          %466 = dma.done %s459, 16
        $region72: #{tpu_custom_call.1} parent=63 // pred_fallthru
          _
        // Predicated region
        $region73: #{tpu_custom_call.1} parent=63 // pred_check
          %p467 = pneg %p181
        $region74: #{tpu_custom_call.1} parent=63 // pred_check_branch
          %469 = sbr.rel (%p467) target = $region76
        $region75: #{tpu_custom_call.1} parent=63 // pred_region
          %471 = dma.done [#allocation8], 256
        $region76: #{tpu_custom_call.1} parent=63 // pred_fallthru
          _
        // Predicated region
        $region77: #{tpu_custom_call.1} parent=63 // pred_check
          %p472 = pneg %p202
        $region78: #{tpu_custom_call.1} parent=63 // pred_check_branch
          %474 = sbr.rel (%p472) target = $region80
        $region79: #{tpu_custom_call.1} parent=63 // pred_region
          %476 = dma.done [#allocation11], 256
        $region80: #{tpu_custom_call.1} parent=63 // pred_fallthru
          _
        // Predicated region
        $region81: #{tpu_custom_call.1} parent=63 // pred_check
          %p477 = pneg %p223
        $region82: #{tpu_custom_call.1} parent=63 // pred_check_branch
          %479 = sbr.rel (%p477) target = $region84
        $region83: #{tpu_custom_call.1} parent=63 // pred_region
          %481 = dma.done [#allocation11], 256
        $region84: #{tpu_custom_call.1} parent=63 // pred_fallthru
          _
        // Predicated region
        $region85: #{tpu_custom_call.1} parent=63 // pred_check
          %p482 = pneg %p265
        $region86: #{tpu_custom_call.1} parent=63 // pred_check_branch
          %484 = sbr.rel (%p482) target = $region88
        $region87: #{tpu_custom_call.1} parent=63 // pred_region
          %486 = dma.done [#allocation14], 256
        $region88: #{tpu_custom_call.1} parent=63 // pred_fallthru
          _
        %p487 = scmp.lt.s32.totalorder %s37, 1
        %s488 = scalar_select %p487, %s37, 1
        %s489 = smul.addr %s488, 8
        %s490 = scalar_lea.vmem %s0, %s489
        %p491 = pneg %p66
        %p492 = pneg %p63
        %s493 = sand.u32 %s79, 1
        %s494 = scalar_lea.sflag [#allocation5], %s493
        %s495 = sand.u32 %s79, 1
        %s496 = scalar_lea.vmem [#allocation4], %s495
        %p497 = pneg %p92
        %p498 = pneg %p89
        %s499 = sand.u32 %s33, 1
        %s500 = scalar_lea.sflag [#allocation8], %s499
        %s501 = sand.u32 %s105, 1
        %s502 = scalar_lea.vmem [#allocation7], %s501
        %p503 = pneg %p118
        %p504 = pneg %p115
        %p505 = pneg %p139
        %p506 = pneg %p136
        %p507 = pneg %p160
        %p508 = pneg %p157
        %p509 = pneg %p181
        %p510 = pneg %p178
        %p511 = pneg %p202
        %p512 = pneg %p199
        %p513 = pneg %p223
        %p514 = pneg %p220
        %p515 = pneg %p244
        %p516 = pneg %p241
        %p517 = pneg %p265
        %p518 = pneg %p262
        %p519 = pneg %p286
        %p520 = pneg %p283
        %p521 = pneg %p314
        %p522 = pneg %p311
        %s523 = sand.u32 %s301, 1
        %s524 = scalar_lea.sflag [#allocation6], %s523
        %s525 = sand.u32 %s301, 1
        %s526 = smul.addr %s525, 8
        %s527 = scalar_lea.vmem [#allocation15], %s526
        %p528 = scmp.lt.s32.totalorder %s37, 1
        %s529 = scalar_select %p528, %s37, 1
        %s530 = smul.addr %s529, 8
        %s531 = scalar_lea.vmem %s0, %s530
        %v533 = vld [vmem:[#allocation13] sm:$0xff]
        %v534 = vld [vmem:[#allocation13 + $0x8] sm:$0x1]
        %v535 = vld [vmem:[%s10] sm:$0x1]
        %p536 = scmp.eq.s32.totalorder %s38, 0
        // Predicated region
        $region89: #{tpu_custom_call.1} parent=63 // pred_check
          %p537 = pneg %p536
        $region90: #{tpu_custom_call.1} parent=63 // pred_check_branch
          %539 = sbr.rel (%p537) target = $region92
        $region91: #{tpu_custom_call.1} parent=63 // pred_region
          %v540 = vld [vmem:[%s531] sm:$0xff]
          %v541 = vpack.c.bf16 %v540, %v540
          %v542 = vld [vmem:[%s4] sm:$0xf]
          %v543 = vld [vmem:[%s4 + $0x4] sm:$0xf]
          %v544 = vld [vmem:[%s4 + $0x8] sm:$0xf]
          %v545 = vld [vmem:[%s4 + $0xc] sm:$0xf]
          %v546 = vperm.slane %v533, 1
          %v551 = vunpack.c.l.b16 %v542
          %v552 = vunpack.c.l.b16 %v543
          %v553 = vunpack.c.l.b16 %v544
          %v554 = vunpack.c.l.b16 %v545
          %v555 = vpack.c.b16 %v552, %v551
          %v556 = vpack.c.b16 %v554, %v553
          %vm559 = vcmask 261120
          %v561 = vsel %vm559, %v541, 0
          %563 = vmatpush.bf16.msra.mxu0 0
          %564 = vmatpush.bf16.msra.mxu0 0
          %565 = vmatpush.bf16.msra.mxu0 0
          %566 = vmatpush.bf16.msra.mxu0 0
          %567 = vmatpush.bf16.msra.mxu0 0
          %568 = vmatpush.bf16.msra.mxu0 0
          %569 = vmatpush.bf16.msra.mxu0 %v556
          %570 = vmatpush.bf16.msra.mxu0 %v555
          %571 = vmatmul.bf16.gmra.mxu0 %v561
          %v572 = vpop.f32.mrf.mxu0
          %v573 = vadd.f32 %v546, %v572
          %v574 = vpop.f32.mrf.mxu0
          %575 = vdwg.mxu0
          %v576 = vld [vmem:[#allocation9] sm:$0xf]
          %v577 = vld [vmem:[#allocation9 + $0x4] sm:$0xf]
          %v578 = vld [vmem:[#allocation9 + $0x8] sm:$0xf]
          %v579 = vld [vmem:[#allocation9 + $0xc] sm:$0xf]
          %v580 = vperm.slane %v533, 2
          %v585 = vunpack.c.l.b16 %v576
          %v586 = vunpack.c.l.b16 %v577
          %v587 = vunpack.c.l.b16 %v578
          %v588 = vunpack.c.l.b16 %v579
          %v589 = vpack.c.b16 %v586, %v585
          %v590 = vpack.c.b16 %v588, %v587
          %593 = vmatpush.bf16.msra.mxu0 0
          %594 = vmatpush.bf16.msra.mxu0 0
          %595 = vmatpush.bf16.msra.mxu0 0
          %596 = vmatpush.bf16.msra.mxu0 0
          %597 = vmatpush.bf16.msra.mxu0 0
          %598 = vmatpush.bf16.msra.mxu0 0
          %599 = vmatpush.bf16.msra.mxu0 %v590
          %600 = vmatpush.bf16.msra.mxu0 %v589
          %601 = vmatmul.bf16.gmra.mxu0 %v561
          %v602 = vpop.f32.mrf.mxu0
          %v603 = vadd.f32 %v580, %v602
          %v604 = vpop.f32.mrf.mxu0
          %605 = vdwg.mxu0
          %v606 = vpack.c.bf16 %v573, %v573
          %vm607 = vcmask 257024
          %608 = vst.msk [vmem:[#allocation2] sm:$0xf] %vm607, %v606
          %v609 = vpack.c.bf16 %v603, %v603
          %610 = vst.msk [vmem:[#allocation3] sm:$0xf] %vm607, %v609
        $region92: #{tpu_custom_call.1} parent=63 // pred_fallthru
          _
        %s611 = smul.u32 %s38, 8
        %s612 = scalar_lea.vmem %s531, %s611
        %v613 = vld [vmem:[%s612] sm:$0xff]
        %v614 = vld [vmem:[%s452] sm:$0x1]
        %v615 = vld [vmem:[%s461] sm:$0x1]
        %v616 = vlaneseq
        %v617 = vshrl.u32 %v616, 7
        %v618 = vstv %s611
        %v619 = vadd.s32 %v617, %v618
        %vm620 = vcmp.eq.s32.totalorder %v619, 1
        %v621 = vsel %vm620, 1, 0
        %vm622 = vcmp.eq.s32.totalorder %v621, 1
        %v624 = vperm.slane %v614, 0
        %v626 = vsel %vm622, %v624, %v613
        %v627 = vpack.c.bf16 %v626, %v626
        %v628 = vld [vmem:[%s3] sm:$0xf]
        %v629 = vld [vmem:[%s3 + $0x4] sm:$0xf]
        %v630 = vld [vmem:[%s3 + $0x8] sm:$0xf]
        %v631 = vld [vmem:[%s3 + $0xc] sm:$0xf]
        %v632 = vperm.slane %v533, 0
        %v637 = vunpack.c.l.b16 %v628
        %v638 = vunpack.c.l.b16 %v629
        %v639 = vunpack.c.l.b16 %v630
        %v640 = vunpack.c.l.b16 %v631
        %v641 = vpack.c.b16 %v638, %v637
        %v642 = vpack.c.b16 %v640, %v639
        %vm645 = vcmask 261120
        %v647 = vsel %vm645, %v627, 0
        %649 = vmatpush.bf16.msra.mxu0 0
        %650 = vmatpush.bf16.msra.mxu0 0
        %651 = vmatpush.bf16.msra.mxu0 0
        %652 = vmatpush.bf16.msra.mxu0 0
        %653 = vmatpush.bf16.msra.mxu0 0
        %654 = vmatpush.bf16.msra.mxu0 0
        %655 = vmatpush.bf16.msra.mxu0 %v642
        %656 = vmatpush.bf16.msra.mxu0 %v641
        %657 = vmatmul.bf16.gmra.mxu0 %v647
        %v658 = vpop.f32.mrf.mxu0
        %v659 = vadd.f32 %v632, %v658
        %v660 = vpop.f32.mrf.mxu0
        %661 = vdwg.mxu0
        %v662 = vpack.c.bf16 %v659, %v659
        %664 = vrot.lane.b32.xlu0 %v662, 120
        %v665 = vpop.permute.xlu0 %664
        %666 = vrot.lane.b32.xlu0 %v662, 112
        %v667 = vpop.permute.xlu0 %666
        %668 = vrot.lane.b32.xlu0 %v662, 104
        %v669 = vpop.permute.xlu0 %668
        %v670 = vld [vmem:[#allocation2] sm:$0xf]
        %672 = vrot.lane.b32.xlu0 %v670, 120
        %v673 = vpop.permute.xlu0 %672
        %675 = vrot.lane.b32.xlu0 %v670, 112
        %v676 = vpop.permute.xlu0 %675
        %678 = vrot.lane.b32.xlu0 %v670, 104
        %v679 = vpop.permute.xlu0 %678
        %v681 = vld [vmem:[#allocation3] sm:$0xf]
        %683 = vrot.lane.b32.xlu0 %v681, 120
        %v684 = vpop.permute.xlu0 %683
        %686 = vrot.lane.b32.xlu0 %v681, 112
        %v687 = vpop.permute.xlu0 %686
        %689 = vrot.lane.b32.xlu0 %v681, 104
        %v690 = vpop.permute.xlu0 %689
        %692 = vxpose.xlu0.c.b16.start [1/8] %v670, 128
        %693 = vxpose.xlu0.c.b16.cont [2/8] 0, 128
        %694 = vxpose.xlu0.c.b16.cont [3/8] 0, 128
        %695 = vxpose.xlu0.c.b16.cont [4/8] 0, 128
        %696 = vxpose.xlu0.c.b16.cont [5/8] 0, 128
        %697 = vxpose.xlu0.c.b16.cont [6/8] 0, 128
        %698 = vxpose.xlu0.c.b16.cont [7/8] 0, 128
        %699 = vxpose.xlu0.c.b16.end [8/8] 0, 128
        %v700 = vpop.trf.xlu0
        %v701 = vpop.trf.xlu0
        %v702 = vpop.trf.xlu0
        %v703 = vpop.trf.xlu0
        %v704 = vpop.trf.xlu0
        %v705 = vpop.trf.xlu0
        %v706 = vpop.trf.xlu0
        %v707 = vpop.trf.xlu0
        %708 = vxpose.xlu0.c.b16.start [1/8] %v673, 128
        %709 = vxpose.xlu0.c.b16.cont [2/8] 0, 128
        %710 = vxpose.xlu0.c.b16.cont [3/8] 0, 128
        %711 = vxpose.xlu0.c.b16.cont [4/8] 0, 128
        %712 = vxpose.xlu0.c.b16.cont [5/8] 0, 128
        %713 = vxpose.xlu0.c.b16.cont [6/8] 0, 128
        %714 = vxpose.xlu0.c.b16.cont [7/8] 0, 128
        %715 = vxpose.xlu0.c.b16.end [8/8] 0, 128
        %v716 = vpop.trf.xlu0
        %v717 = vpop.trf.xlu0
        %v718 = vpop.trf.xlu0
        %v719 = vpop.trf.xlu0
        %v720 = vpop.trf.xlu0
        %v721 = vpop.trf.xlu0
        %v722 = vpop.trf.xlu0
        %v723 = vpop.trf.xlu0
        %724 = vxpose.xlu0.c.b16.start [1/8] %v676, 128
        %725 = vxpose.xlu0.c.b16.cont [2/8] 0, 128
        %726 = vxpose.xlu0.c.b16.cont [3/8] 0, 128
        %727 = vxpose.xlu0.c.b16.cont [4/8] 0, 128
        %728 = vxpose.xlu0.c.b16.cont [5/8] 0, 128
        %729 = vxpose.xlu0.c.b16.cont [6/8] 0, 128
        %730 = vxpose.xlu0.c.b16.cont [7/8] 0, 128
        %731 = vxpose.xlu0.c.b16.end [8/8] 0, 128
        %v732 = vpop.trf.xlu0
        %v733 = vpop.trf.xlu0
        %v734 = vpop.trf.xlu0
        %v735 = vpop.trf.xlu0
        %v736 = vpop.trf.xlu0
        %v737 = vpop.trf.xlu0
        %v738 = vpop.trf.xlu0
        %v739 = vpop.trf.xlu0
        %740 = vxpose.xlu0.c.b16.start [1/8] %v679, 128
        %741 = vxpose.xlu0.c.b16.cont [2/8] 0, 128
        %742 = vxpose.xlu0.c.b16.cont [3/8] 0, 128
        %743 = vxpose.xlu0.c.b16.cont [4/8] 0, 128
        %744 = vxpose.xlu0.c.b16.cont [5/8] 0, 128
        %745 = vxpose.xlu0.c.b16.cont [6/8] 0, 128
        %746 = vxpose.xlu0.c.b16.cont [7/8] 0, 128
        %747 = vxpose.xlu0.c.b16.end [8/8] 0, 128
        %v748 = vpop.trf.xlu0
        %v749 = vpop.trf.xlu0
        %v750 = vpop.trf.xlu0
        %v751 = vpop.trf.xlu0
        %v752 = vpop.trf.xlu0
        %v753 = vpop.trf.xlu0
        %v754 = vpop.trf.xlu0
        %v755 = vpop.trf.xlu0
        %vm756 = vcmask 64512
        %v758 = vsel %vm756, %v662, 0
        %vm760 = vcmask 1043456
        %v762 = vsel %vm760, %v700, 0
        %764 = vmatpush.bf16.msra.mxu0 0
        %765 = vmatpush.bf16.msra.mxu0 0
        %766 = vmatpush.bf16.msra.mxu0 0
        %767 = vmatpush.bf16.msra.mxu0 0
        %768 = vmatpush.bf16.msra.mxu0 0
        %769 = vmatpush.bf16.msra.mxu0 0
        %770 = vmatpush.bf16.msra.mxu0 0
        %771 = vmatpush.bf16.msra.mxu0 %v762
        %772 = vmatmul.bf16.gmra.mxu0 %v758
        %v773 = vpop.f32.mrf.mxu0
        %v774 = vadd.f32 0.0, %v773
        %v775 = vpop.f32.mrf.mxu0
        %776 = vdwg.mxu0
        %v778 = vsel %vm756, %v665, 0
        %v781 = vsel %vm760, %v716, 0
        %783 = vmatpush.bf16.msra.mxu0 0
        %784 = vmatpush.bf16.msra.mxu0 0
        %785 = vmatpush.bf16.msra.mxu0 0
        %786 = vmatpush.bf16.msra.mxu0 0
        %787 = vmatpush.bf16.msra.mxu0 0
        %788 = vmatpush.bf16.msra.mxu0 0
        %789 = vmatpush.bf16.msra.mxu0 0
        %790 = vmatpush.bf16.msra.mxu0 %v781
        %791 = vmatmul.bf16.gmra.mxu0 %v778
        %v792 = vpop.f32.mrf.mxu0
        %v793 = vadd.f32 0.0, %v792
        %v794 = vpop.f32.mrf.mxu0
        %795 = vdwg.mxu0
        %v797 = vsel %vm756, %v667, 0
        %v800 = vsel %vm760, %v732, 0
        %802 = vmatpush.bf16.msra.mxu0 0
        %803 = vmatpush.bf16.msra.mxu0 0
        %804 = vmatpush.bf16.msra.mxu0 0
        %805 = vmatpush.bf16.msra.mxu0 0
        %806 = vmatpush.bf16.msra.mxu0 0
        %807 = vmatpush.bf16.msra.mxu0 0
        %808 = vmatpush.bf16.msra.mxu0 0
        %809 = vmatpush.bf16.msra.mxu0 %v800
        %810 = vmatmul.bf16.gmra.mxu0 %v797
        %v811 = vpop.f32.mrf.mxu0
        %v812 = vadd.f32 0.0, %v811
        %v813 = vpop.f32.mrf.mxu0
        %814 = vdwg.mxu0
        %v816 = vsel %vm756, %v669, 0
        %v819 = vsel %vm760, %v748, 0
        %821 = vmatpush.bf16.msra.mxu0 0
        %822 = vmatpush.bf16.msra.mxu0 0
        %823 = vmatpush.bf16.msra.mxu0 0
        %824 = vmatpush.bf16.msra.mxu0 0
        %825 = vmatpush.bf16.msra.mxu0 0
        %826 = vmatpush.bf16.msra.mxu0 0
        %827 = vmatpush.bf16.msra.mxu0 0
        %828 = vmatpush.bf16.msra.mxu0 %v819
        %829 = vmatmul.bf16.gmra.mxu0 %v816
        %v830 = vpop.f32.mrf.mxu0
        %v831 = vadd.f32 0.0, %v830
        %v832 = vpop.f32.mrf.mxu0
        %833 = vdwg.mxu0
        %v834 = vmul.f32 %v774, 0.35355338
        %v835 = vmul.f32 %v793, 0.35355338
        %v836 = vmul.f32 %v812, 0.35355338
        %v837 = vmul.f32 %v831, 0.35355338
        %v839 = vperm.slane %v615, 0
        %v841 = vadd.f32 %v834, %v839
        %v842 = vadd.f32 %v835, %v839
        %v843 = vadd.f32 %v836, %v839
        %v844 = vadd.f32 %v837, %v839
        %v845 = vsel %vm756, %v841, -inf
        %846 = vmax.xlane.f32.xlu0 %v845
        %v847 = vpop.xlane.xlu0 %846
        %v848 = vsel %vm756, %v842, -inf
        %849 = vmax.xlane.f32.xlu0 %v848
        %v850 = vpop.xlane.xlu0 %849
        %v851 = vsel %vm756, %v843, -inf
        %852 = vmax.xlane.f32.xlu0 %v851
        %v853 = vpop.xlane.xlu0 %852
        %v854 = vsel %vm756, %v844, -inf
        %855 = vmax.xlane.f32.xlu0 %v854
        %v856 = vpop.xlane.xlu0 %855
        %v857 = vsub.f32 %v841, %v847
        %v858 = vsub.f32 %v842, %v850
        %v859 = vsub.f32 %v843, %v853
        %v860 = vsub.f32 %v844, %v856
        %v861 = vmul.f32 %v857, 1.442695
        %v862 = vpow.pop %v861
        %v863 = vmul.f32 %v858, 1.442695
        %v864 = vpow.pop %v863
        %v865 = vmul.f32 %v859, 1.442695
        %v866 = vpow.pop %v865
        %v867 = vmul.f32 %v860, 1.442695
        %v868 = vpow.pop %v867
        %v869 = vsel %vm756, %v862, 0.0
        %870 = vadd.xlane.f32.xlu0 %v869
        %v871 = vpop.xlane.xlu0 %870
        %v872 = vsel %vm756, %v864, 0.0
        %873 = vadd.xlane.f32.xlu0 %v872
        %v874 = vpop.xlane.xlu0 %873
        %v875 = vsel %vm756, %v866, 0.0
        %876 = vadd.xlane.f32.xlu0 %v875
        %v877 = vpop.xlane.xlu0 %876
        %v878 = vsel %vm756, %v868, 0.0
        %879 = vadd.xlane.f32.xlu0 %v878
        %v880 = vpop.xlane.xlu0 %879
        %v881 = vrcp.pop %v871
        %v882 = vrcp.pop %v874
        %v883 = vrcp.pop %v877
        %v884 = vrcp.pop %v880
        %v885 = vmul.f32 %v862, %v881
        %v886 = vmul.f32 %v864, %v882
        %v887 = vmul.f32 %v866, %v883
        %v888 = vmul.f32 %v868, %v884
        %v889 = vpack.c.bf16 %v885, %v885
        %v890 = vpack.c.bf16 %v886, %v886
        %v891 = vpack.c.bf16 %v887, %v887
        %v892 = vpack.c.bf16 %v888, %v888
        %893 = vxpose.xlu0.c.b16.start [1/8] %v681, 128
        %894 = vxpose.xlu0.c.b16.cont [2/8] 0, 128
        %895 = vxpose.xlu0.c.b16.cont [3/8] 0, 128
        %896 = vxpose.xlu0.c.b16.cont [4/8] 0, 128
        %897 = vxpose.xlu0.c.b16.cont [5/8] 0, 128
        %898 = vxpose.xlu0.c.b16.cont [6/8] 0, 128
        %899 = vxpose.xlu0.c.b16.cont [7/8] 0, 128
        %900 = vxpose.xlu0.c.b16.end [8/8] 0, 128
        %v901 = vpop.trf.xlu0
        %v902 = vpop.trf.xlu0
        %v903 = vpop.trf.xlu0
        %v904 = vpop.trf.xlu0
        %v905 = vpop.trf.xlu0
        %v906 = vpop.trf.xlu0
        %v907 = vpop.trf.xlu0
        %v908 = vpop.trf.xlu0
        %909 = vxpose.xlu0.c.b16.start [1/8] %v684, 128
        %910 = vxpose.xlu0.c.b16.cont [2/8] 0, 128
        %911 = vxpose.xlu0.c.b16.cont [3/8] 0, 128
        %912 = vxpose.xlu0.c.b16.cont [4/8] 0, 128
        %913 = vxpose.xlu0.c.b16.cont [5/8] 0, 128
        %914 = vxpose.xlu0.c.b16.cont [6/8] 0, 128
        %915 = vxpose.xlu0.c.b16.cont [7/8] 0, 128
        %916 = vxpose.xlu0.c.b16.end [8/8] 0, 128
        %v917 = vpop.trf.xlu0
        %v918 = vpop.trf.xlu0
        %v919 = vpop.trf.xlu0
        %v920 = vpop.trf.xlu0
        %v921 = vpop.trf.xlu0
        %v922 = vpop.trf.xlu0
        %v923 = vpop.trf.xlu0
        %v924 = vpop.trf.xlu0
        %925 = vxpose.xlu0.c.b16.start [1/8] %v687, 128
        %926 = vxpose.xlu0.c.b16.cont [2/8] 0, 128
        %927 = vxpose.xlu0.c.b16.cont [3/8] 0, 128
        %928 = vxpose.xlu0.c.b16.cont [4/8] 0, 128
        %929 = vxpose.xlu0.c.b16.cont [5/8] 0, 128
        %930 = vxpose.xlu0.c.b16.cont [6/8] 0, 128
        %931 = vxpose.xlu0.c.b16.cont [7/8] 0, 128
        %932 = vxpose.xlu0.c.b16.end [8/8] 0, 128
        %v933 = vpop.trf.xlu0
        %v934 = vpop.trf.xlu0
        %v935 = vpop.trf.xlu0
        %v936 = vpop.trf.xlu0
        %v937 = vpop.trf.xlu0
        %v938 = vpop.trf.xlu0
        %v939 = vpop.trf.xlu0
        %v940 = vpop.trf.xlu0
        %941 = vxpose.xlu0.c.b16.start [1/8] %v690, 128
        %942 = vxpose.xlu0.c.b16.cont [2/8] 0, 128
        %943 = vxpose.xlu0.c.b16.cont [3/8] 0, 128
        %944 = vxpose.xlu0.c.b16.cont [4/8] 0, 128
        %945 = vxpose.xlu0.c.b16.cont [5/8] 0, 128
        %946 = vxpose.xlu0.c.b16.cont [6/8] 0, 128
        %947 = vxpose.xlu0.c.b16.cont [7/8] 0, 128
        %948 = vxpose.xlu0.c.b16.end [8/8] 0, 128
        %v949 = vpop.trf.xlu0
        %v950 = vpop.trf.xlu0
        %v951 = vpop.trf.xlu0
        %v952 = vpop.trf.xlu0
        %v953 = vpop.trf.xlu0
        %v954 = vpop.trf.xlu0
        %v955 = vpop.trf.xlu0
        %v956 = vpop.trf.xlu0
        %v958 = vsel %vm756, %v901, 0
        %v961 = vsel %vm756, %v889, 0
        %963 = vmatpush.bf16.xpose.msra.mxu0 0
        %964 = vmatpush.bf16.xpose.msra.mxu0 0
        %965 = vmatpush.bf16.xpose.msra.mxu0 0
        %966 = vmatpush.bf16.xpose.msra.mxu0 0
        %967 = vmatpush.bf16.xpose.msra.mxu0 0
        %968 = vmatpush.bf16.xpose.msra.mxu0 0
        %969 = vmatpush.bf16.xpose.msra.mxu0 0
        %970 = vmatpush.bf16.xpose.msra.mxu0 %v961
        %971 = vmatmul.bf16.gmra.mxu0 %v958
        %v972 = vpop.f32.mrf.mxu0
        %v973 = vadd.f32 0.0, %v972
        %v974 = vpop.f32.mrf.mxu0
        %975 = vdwg.mxu0
        %v977 = vsel %vm756, %v917, 0
        %v980 = vsel %vm756, %v890, 0
        %982 = vmatpush.bf16.xpose.msra.mxu0 0
        %983 = vmatpush.bf16.xpose.msra.mxu0 0
        %984 = vmatpush.bf16.xpose.msra.mxu0 0
        %985 = vmatpush.bf16.xpose.msra.mxu0 0
        %986 = vmatpush.bf16.xpose.msra.mxu0 0
        %987 = vmatpush.bf16.xpose.msra.mxu0 0
        %988 = vmatpush.bf16.xpose.msra.mxu0 0
        %989 = vmatpush.bf16.xpose.msra.mxu0 %v980
        %990 = vmatmul.bf16.gmra.mxu0 %v977
        %v991 = vpop.f32.mrf.mxu0
        %v992 = vadd.f32 0.0, %v991
        %v993 = vpop.f32.mrf.mxu0
        %994 = vdwg.mxu0
        %v996 = vsel %vm756, %v933, 0
        %v999 = vsel %vm756, %v891, 0
        %1001 = vmatpush.bf16.xpose.msra.mxu0 0
        %1002 = vmatpush.bf16.xpose.msra.mxu0 0
        %1003 = vmatpush.bf16.xpose.msra.mxu0 0
        %1004 = vmatpush.bf16.xpose.msra.mxu0 0
        %1005 = vmatpush.bf16.xpose.msra.mxu0 0
        %1006 = vmatpush.bf16.xpose.msra.mxu0 0
        %1007 = vmatpush.bf16.xpose.msra.mxu0 0
        %1008 = vmatpush.bf16.xpose.msra.mxu0 %v999
        %1009 = vmatmul.bf16.gmra.mxu0 %v996
        %v1010 = vpop.f32.mrf.mxu0
        %v1011 = vadd.f32 0.0, %v1010
        %v1012 = vpop.f32.mrf.mxu0
        %1013 = vdwg.mxu0
        %v1015 = vsel %vm756, %v949, 0
        %v1018 = vsel %vm756, %v892, 0
        %1020 = vmatpush.bf16.xpose.msra.mxu0 0
        %1021 = vmatpush.bf16.xpose.msra.mxu0 0
        %1022 = vmatpush.bf16.xpose.msra.mxu0 0
        %1023 = vmatpush.bf16.xpose.msra.mxu0 0
        %1024 = vmatpush.bf16.xpose.msra.mxu0 0
        %1025 = vmatpush.bf16.xpose.msra.mxu0 0
        %1026 = vmatpush.bf16.xpose.msra.mxu0 0
        %1027 = vmatpush.bf16.xpose.msra.mxu0 %v1018
        %1028 = vmatmul.bf16.gmra.mxu0 %v1015
        %v1029 = vpop.f32.mrf.mxu0
        %v1030 = vadd.f32 0.0, %v1029
        %v1031 = vpop.f32.mrf.mxu0
        %1032 = vdwg.mxu0
        %1033 = vxpose.xlu0.b32.start [1/16] %v973, 128
        %1034 = vxpose.xlu0.b32.cont [2/16] 0.0, 128
        %1035 = vxpose.xlu0.b32.cont [3/16] 0.0, 128
        %1036 = vxpose.xlu0.b32.cont [4/16] 0.0, 128
        %1037 = vxpose.xlu0.b32.cont [5/16] 0.0, 128
        %1038 = vxpose.xlu0.b32.cont [6/16] 0.0, 128
        %1039 = vxpose.xlu0.b32.cont [7/16] 0.0, 128
        %1040 = vxpose.xlu0.b32.cont [8/16] 0.0, 128
        %1041 = vxpose.xlu0.b32.cont [9/16] 0.0, 128
        %1042 = vxpose.xlu0.b32.cont [10/16] 0.0, 128
        %1043 = vxpose.xlu0.b32.cont [11/16] 0.0, 128
        %1044 = vxpose.xlu0.b32.cont [12/16] 0.0, 128
        %1045 = vxpose.xlu0.b32.cont [13/16] 0.0, 128
        %1046 = vxpose.xlu0.b32.cont [14/16] 0.0, 128
        %1047 = vxpose.xlu0.b32.cont [15/16] 0.0, 128
        %1048 = vxpose.xlu0.b32.end [16/16] 0.0, 128
        %v1049 = vpop.trf.xlu0
        %v1050 = vpop.trf.xlu0
        %v1051 = vpop.trf.xlu0
        %v1052 = vpop.trf.xlu0
        %v1053 = vpop.trf.xlu0
        %v1054 = vpop.trf.xlu0
        %v1055 = vpop.trf.xlu0
        %v1056 = vpop.trf.xlu0
        %v1057 = vpop.trf.xlu0
        %v1058 = vpop.trf.xlu0
        %v1059 = vpop.trf.xlu0
        %v1060 = vpop.trf.xlu0
        %v1061 = vpop.trf.xlu0
        %v1062 = vpop.trf.xlu0
        %v1063 = vpop.trf.xlu0
        %v1064 = vpop.trf.xlu0
        %1065 = vxpose.xlu0.b32.start [1/16] %v992, 128
        %1066 = vxpose.xlu0.b32.cont [2/16] 0.0, 128
        %1067 = vxpose.xlu0.b32.cont [3/16] 0.0, 128
        %1068 = vxpose.xlu0.b32.cont [4/16] 0.0, 128
        %1069 = vxpose.xlu0.b32.cont [5/16] 0.0, 128
        %1070 = vxpose.xlu0.b32.cont [6/16] 0.0, 128
        %1071 = vxpose.xlu0.b32.cont [7/16] 0.0, 128
        %1072 = vxpose.xlu0.b32.cont [8/16] 0.0, 128
        %1073 = vxpose.xlu0.b32.cont [9/16] 0.0, 128
        %1074 = vxpose.xlu0.b32.cont [10/16] 0.0, 128
        %1075 = vxpose.xlu0.b32.cont [11/16] 0.0, 128
        %1076 = vxpose.xlu0.b32.cont [12/16] 0.0, 128
        %1077 = vxpose.xlu0.b32.cont [13/16] 0.0, 128
        %1078 = vxpose.xlu0.b32.cont [14/16] 0.0, 128
        %1079 = vxpose.xlu0.b32.cont [15/16] 0.0, 128
        %1080 = vxpose.xlu0.b32.end [16/16] 0.0, 128
        %v1081 = vpop.trf.xlu0
        %v1082 = vpop.trf.xlu0
        %v1083 = vpop.trf.xlu0
        %v1084 = vpop.trf.xlu0
        %v1085 = vpop.trf.xlu0
        %v1086 = vpop.trf.xlu0
        %v1087 = vpop.trf.xlu0
        %v1088 = vpop.trf.xlu0
        %v1089 = vpop.trf.xlu0
        %v1090 = vpop.trf.xlu0
        %v1091 = vpop.trf.xlu0
        %v1092 = vpop.trf.xlu0
        %v1093 = vpop.trf.xlu0
        %v1094 = vpop.trf.xlu0
        %v1095 = vpop.trf.xlu0
        %v1096 = vpop.trf.xlu0
        %1097 = vxpose.xlu0.b32.start [1/16] %v1011, 128
        %1098 = vxpose.xlu0.b32.cont [2/16] 0.0, 128
        %1099 = vxpose.xlu0.b32.cont [3/16] 0.0, 128
        %1100 = vxpose.xlu0.b32.cont [4/16] 0.0, 128
        %1101 = vxpose.xlu0.b32.cont [5/16] 0.0, 128
        %1102 = vxpose.xlu0.b32.cont [6/16] 0.0, 128
        %1103 = vxpose.xlu0.b32.cont [7/16] 0.0, 128
        %1104 = vxpose.xlu0.b32.cont [8/16] 0.0, 128
        %1105 = vxpose.xlu0.b32.cont [9/16] 0.0, 128
        %1106 = vxpose.xlu0.b32.cont [10/16] 0.0, 128
        %1107 = vxpose.xlu0.b32.cont [11/16] 0.0, 128
        %1108 = vxpose.xlu0.b32.cont [12/16] 0.0, 128
        %1109 = vxpose.xlu0.b32.cont [13/16] 0.0, 128
        %1110 = vxpose.xlu0.b32.cont [14/16] 0.0, 128
        %1111 = vxpose.xlu0.b32.cont [15/16] 0.0, 128
        %1112 = vxpose.xlu0.b32.end [16/16] 0.0, 128
        %v1113 = vpop.trf.xlu0
        %v1114 = vpop.trf.xlu0
        %v1115 = vpop.trf.xlu0
        %v1116 = vpop.trf.xlu0
        %v1117 = vpop.trf.xlu0
        %v1118 = vpop.trf.xlu0
        %v1119 = vpop.trf.xlu0
        %v1120 = vpop.trf.xlu0
        %v1121 = vpop.trf.xlu0
        %v1122 = vpop.trf.xlu0
        %v1123 = vpop.trf.xlu0
        %v1124 = vpop.trf.xlu0
        %v1125 = vpop.trf.xlu0
        %v1126 = vpop.trf.xlu0
        %v1127 = vpop.trf.xlu0
        %v1128 = vpop.trf.xlu0
        %1129 = vxpose.xlu0.b32.start [1/16] %v1030, 128
        %1130 = vxpose.xlu0.b32.cont [2/16] 0.0, 128
        %1131 = vxpose.xlu0.b32.cont [3/16] 0.0, 128
        %1132 = vxpose.xlu0.b32.cont [4/16] 0.0, 128
        %1133 = vxpose.xlu0.b32.cont [5/16] 0.0, 128
        %1134 = vxpose.xlu0.b32.cont [6/16] 0.0, 128
        %1135 = vxpose.xlu0.b32.cont [7/16] 0.0, 128
        %1136 = vxpose.xlu0.b32.cont [8/16] 0.0, 128
        %1137 = vxpose.xlu0.b32.cont [9/16] 0.0, 128
        %1138 = vxpose.xlu0.b32.cont [10/16] 0.0, 128
        %1139 = vxpose.xlu0.b32.cont [11/16] 0.0, 128
        %1140 = vxpose.xlu0.b32.cont [12/16] 0.0, 128
        %1141 = vxpose.xlu0.b32.cont [13/16] 0.0, 128
        %1142 = vxpose.xlu0.b32.cont [14/16] 0.0, 128
        %1143 = vxpose.xlu0.b32.cont [15/16] 0.0, 128
        %1144 = vxpose.xlu0.b32.end [16/16] 0.0, 128
        %v1145 = vpop.trf.xlu0
        %v1146 = vpop.trf.xlu0
        %v1147 = vpop.trf.xlu0
        %v1148 = vpop.trf.xlu0
        %v1149 = vpop.trf.xlu0
        %v1150 = vpop.trf.xlu0
        %v1151 = vpop.trf.xlu0
        %v1152 = vpop.trf.xlu0
        %v1153 = vpop.trf.xlu0
        %v1154 = vpop.trf.xlu0
        %v1155 = vpop.trf.xlu0
        %v1156 = vpop.trf.xlu0
        %v1157 = vpop.trf.xlu0
        %v1158 = vpop.trf.xlu0
        %v1159 = vpop.trf.xlu0
        %v1160 = vpop.trf.xlu0
        %v1161 = vrot.slane %v1113, 4
        %vm1162 = vcmask 1047556
        %v1163 = vsel %vm1162, %v1161, %v1049
        %v1164 = vrot.slane %v1049, 4
        %v1165 = vsel %vm1162, %v1113, %v1164
        %v1167 = vunpack.c.l.s4 1983009808
        %v1168 = vunpack.c.0.s8 %v1167
        %v1169 = vperm.slane %v1163, %v1168
        %v1171 = vunpack.c.l.s4 1983009808
        %v1172 = vunpack.c.0.s8 %v1171
        %v1173 = vperm.slane %v1165, %v1172
        %v1174 = vrot.slane %v1145, 4
        %v1175 = vsel %vm1162, %v1174, %v1081
        %v1176 = vrot.slane %v1081, 4
        %v1177 = vsel %vm1162, %v1145, %v1176
        %v1179 = vunpack.c.l.s4 1983009808
        %v1180 = vunpack.c.0.s8 %v1179
        %v1181 = vperm.slane %v1175, %v1180
        %v1183 = vunpack.c.l.s4 1983009808
        %v1184 = vunpack.c.0.s8 %v1183
        %v1185 = vperm.slane %v1177, %v1184
        %v1186 = vrot.slane %v1181, 4
        %v1187 = vsel %vm1162, %v1186, %v1169
        %v1188 = vrot.slane %v1169, 4
        %v1189 = vsel %vm1162, %v1181, %v1188
        %v1191 = vunpack.c.l.s4 1934713408
        %v1192 = vunpack.c.0.s8 %v1191
        %v1193 = vperm.slane %v1187, %v1192
        %v1195 = vunpack.c.l.s4 1934713408
        %v1196 = vunpack.c.0.s8 %v1195
        %v1197 = vperm.slane %v1189, %v1196
        %v1198 = vrot.slane %v1185, 4
        %v1199 = vsel %vm1162, %v1198, %v1173
        %v1200 = vrot.slane %v1173, 4
        %v1201 = vsel %vm1162, %v1185, %v1200
        %v1203 = vunpack.c.l.s4 1934713408
        %v1204 = vunpack.c.0.s8 %v1203
        %v1205 = vperm.slane %v1199, %v1204
        %v1207 = vunpack.c.l.s4 1934713408
        %v1208 = vunpack.c.0.s8 %v1207
        %v1209 = vperm.slane %v1201, %v1208
        %v1210 = vrot.slane %v1193, 4
        %v1211 = vsel %vm1162, 0.0, %v1210
        %v1212 = vrot.slane %v1197, 4
        %v1213 = vsel %vm1162, 0.0, %v1212
        %v1214 = vrot.slane %v1205, 4
        %v1215 = vsel %vm1162, 0.0, %v1214
        %v1216 = vrot.slane %v1209, 4
        %v1217 = vsel %vm1162, 0.0, %v1216
        %v1218 = vsel %vm1162, %v1212, %v1193
        %v1220 = vunpack.c.l.s4 1983009808
        %v1221 = vunpack.c.0.s8 %v1220
        %v1222 = vperm.slane %v1218, %v1221
        %v1223 = vrot.slane %v1213, 4
        %v1224 = vsel %vm1162, %v1223, %v1211
        %v1226 = vunpack.c.l.s4 1983009808
        %v1227 = vunpack.c.0.s8 %v1226
        %v1228 = vperm.slane %v1224, %v1227
        %v1229 = vsel %vm1162, %v1216, %v1205
        %v1231 = vunpack.c.l.s4 1983009808
        %v1232 = vunpack.c.0.s8 %v1231
        %v1233 = vperm.slane %v1229, %v1232
        %v1234 = vrot.slane %v1217, 4
        %v1235 = vsel %vm1162, %v1234, %v1215
        %v1237 = vunpack.c.l.s4 1983009808
        %v1238 = vunpack.c.0.s8 %v1237
        %v1239 = vperm.slane %v1235, %v1238
        %v1240 = vrot.slane %v1228, 4
        %v1241 = vsel %vm1162, %v1240, %v1222
        %v1242 = vrot.slane %v1222, 4
        %v1243 = vsel %vm1162, %v1228, %v1242
        %v1245 = vunpack.c.l.s4 1934713408
        %v1246 = vunpack.c.0.s8 %v1245
        %v1247 = vperm.slane %v1241, %v1246
        %v1249 = vunpack.c.l.s4 1934713408
        %v1250 = vunpack.c.0.s8 %v1249
        %v1251 = vperm.slane %v1243, %v1250
        %v1252 = vrot.slane %v1239, 4
        %v1253 = vsel %vm1162, %v1252, %v1233
        %v1254 = vrot.slane %v1233, 4
        %v1255 = vsel %vm1162, %v1239, %v1254
        %v1257 = vunpack.c.l.s4 1934713408
        %v1258 = vunpack.c.0.s8 %v1257
        %v1259 = vperm.slane %v1253, %v1258
        %v1261 = vunpack.c.l.s4 1934713408
        %v1262 = vunpack.c.0.s8 %v1261
        %v1263 = vperm.slane %v1255, %v1262
        %v1264 = vrot.slane %v1259, 4
        %v1265 = vsel %vm1162, %v1264, %v1247
        %v1266 = vrot.slane %v1247, 4
        %v1267 = vsel %vm1162, %v1259, %v1266
        %v1268 = vrot.slane %v1263, 4
        %v1269 = vsel %vm1162, %v1268, %v1251
        %v1270 = vrot.slane %v1251, 4
        %v1271 = vsel %vm1162, %v1263, %v1270
        %1273 = vrot.lane.b32.xlu0 %v1267, 8
        %v1274 = vpop.permute.xlu0 %1273
        %1277 = vrot.lane.b32.xlu0 %v1269, 16
        %v1278 = vpop.permute.xlu0 %1277
        %1281 = vrot.lane.b32.xlu0 %v1271, 24
        %v1282 = vpop.permute.xlu0 %1281
        %v1284 = vsel %vm756, %v1265, %v1274
        %vm1285 = vcmask 130048
        %v1286 = vsel %vm1285, %v1284, %v1278
        %vm1287 = vcmask 195584
        %v1288 = vsel %vm1287, %v1286, %v1282
        %v1289 = vpack.c.bf16 %v1288, %v1288
        %v1290 = vld [vmem:[#allocation10] sm:$0xf]
        %v1291 = vld [vmem:[#allocation10 + $0x4] sm:$0xf]
        %v1292 = vld [vmem:[#allocation10 + $0x8] sm:$0xf]
        %v1293 = vld [vmem:[#allocation10 + $0xc] sm:$0xf]
        %v1294 = vperm.slane %v533, 3
        %v1299 = vunpack.c.l.b16 %v1290
        %v1300 = vunpack.c.l.b16 %v1291
        %v1301 = vunpack.c.l.b16 %v1292
        %v1302 = vunpack.c.l.b16 %v1293
        %v1303 = vpack.c.b16 %v1300, %v1299
        %v1304 = vpack.c.b16 %v1302, %v1301
        %v1308 = vsel %vm645, %v1289, 0
        %1310 = vmatpush.bf16.msra.mxu0 0
        %1311 = vmatpush.bf16.msra.mxu0 0
        %1312 = vmatpush.bf16.msra.mxu0 0
        %1313 = vmatpush.bf16.msra.mxu0 0
        %1314 = vmatpush.bf16.msra.mxu0 0
        %1315 = vmatpush.bf16.msra.mxu0 0
        %1316 = vmatpush.bf16.msra.mxu0 %v1304
        %1317 = vmatpush.bf16.msra.mxu0 %v1303
        %1318 = vmatmul.bf16.gmra.mxu0 %v1308
        %v1319 = vpop.f32.mrf.mxu0
        %v1320 = vadd.f32 %v1294, %v1319
        %v1321 = vpop.f32.mrf.mxu0
        %1322 = vdwg.mxu0
        %v1323 = vadd.f32 %v613, %v1320
        %v1324 = vsel %vm645, %v1323, 0.0
        %1325 = vadd.xlane.f32.xlu0 %v1324
        %v1326 = vpop.xlane.xlu0 %1325
        %v1327 = vrcp.pop 32.0
        %v1328 = vmul.f32 32.0, %v1327
        %v1329 = vsub.f32 1.0, %v1328
        %v1330 = vmul.f32 %v1327, %v1329
        %v1331 = vadd.f32 %v1327, %v1330
        %vm1332 = vweird.f32 %v1327
        %v1333 = vsel %vm1332, %v1327, %v1331
        %v1334 = vmul.f32 %v1326, %v1333
        %v1335 = vsub.f32 %v1323, %v1334
        %v1336 = vmul.f32 %v1335, %v1335
        %v1337 = vsel %vm645, %v1336, 0.0
        %1338 = vadd.xlane.f32.xlu0 %v1337
        %v1339 = vpop.xlane.xlu0 %1338
        %v1340 = vmul.f32 %v1339, %v1333
        %v1341 = vadd.f32 %v1340, 1e-12
        %v1342 = vrsqrt.pop %v1341
        %v1343 = vmul.f32 %v1342, %v1341
        %v1344 = vmul.f32 %v1343, %v1342
        %v1345 = vmul.f32 0.5, %v1344
        %v1346 = vsub.f32 1.5, %v1345
        %v1347 = vmul.f32 %v1342, %v1346
        %vm1348 = vweird.f32 %v1341
        %vm1349 = vweird.f32 %v1342
        %vm1350 = vmor %vm1348, %vm1349
        %v1351 = vsel %vm1350, %v1342, %v1347
        %v1352 = vmul.f32 %v1335, %v1351
        %v1353 = vperm.slane %v533, 4
        %v1354 = vmul.f32 %v1352, %v1353
        %v1355 = vperm.slane %v533, 5
        %v1356 = vadd.f32 %v1354, %v1355
        %v1357 = vpack.c.bf16 %v1356, %v1356
        %v1358 = vld [vmem:[#allocation12] sm:$0xf]
        %v1359 = vld [vmem:[#allocation12 + $0x4] sm:$0xf]
        %v1360 = vld [vmem:[#allocation12 + $0x8] sm:$0xf]
        %v1361 = vld [vmem:[#allocation12 + $0xc] sm:$0xf]
        %v1363 = vperm.slane %v535, 0
        %v1369 = vunpack.c.l.b16 %v1358
        %v1370 = vunpack.c.l.b16 %v1359
        %v1371 = vunpack.c.l.b16 %v1360
        %v1372 = vunpack.c.l.b16 %v1361
        %v1373 = vpack.c.b16 %v1370, %v1369
        %v1374 = vpack.c.b16 %v1372, %v1371
        %v1378 = vsel %vm645, %v1357, 0
        %1380 = vmatpush.bf16.msra.mxu0 0
        %1381 = vmatpush.bf16.msra.mxu0 0
        %1382 = vmatpush.bf16.msra.mxu0 0
        %1383 = vmatpush.bf16.msra.mxu0 0
        %1384 = vmatpush.bf16.msra.mxu0 0
        %1385 = vmatpush.bf16.msra.mxu0 0
        %1386 = vmatpush.bf16.msra.mxu0 %v1374
        %1387 = vmatpush.bf16.msra.mxu0 %v1373
        %1388 = vmatmul.bf16.gmra.mxu0 %v1378
        %v1389 = vpop.f32.mrf.mxu0
        %v1390 = vadd.f32 %v1363, %v1389
        %v1391 = vpop.f32.mrf.mxu0
        %1392 = vdwg.mxu0
        %v1393 = vmul.f32 %v1390, %v1390
        %v1394 = vmul.f32 %v1390, %v1393
        %v1395 = vmul.f32 %v1394, 0.044715
        %v1396 = vadd.f32 %v1390, %v1395
        %v1397 = vmul.f32 %v1396, 0.7978846
        %v1398 = vtanh.pop %v1397
        %v1399 = vadd.f32 %v1398, 1.0
        %v1400 = vmul.f32 %v1399, 0.5
        %v1401 = vmul.f32 %v1390, %v1400
        %v1402 = vmul.f32 %v1401, %v1401
        %v1403 = vmul.f32 %v1401, %v1402
        %v1404 = vmul.f32 %v1403, 0.044715
        %v1405 = vadd.f32 %v1401, %v1404
        %v1406 = vmul.f32 %v1405, 0.7978846
        %v1407 = vtanh.pop %v1406
        %v1408 = vadd.f32 %v1407, 1.0
        %v1409 = vmul.f32 %v1408, 0.5
        %v1410 = vmul.f32 %v1401, %v1409
        %v1411 = vpack.c.bf16 %v1410, %v1410
        %v1412 = vld [vmem:[%s8] sm:$0xf]
        %v1413 = vld [vmem:[%s8 + $0x4] sm:$0xf]
        %v1414 = vld [vmem:[%s8 + $0x8] sm:$0xf]
        %v1415 = vld [vmem:[%s8 + $0xc] sm:$0xf]
        %v1416 = vld [vmem:[%s8 + $0x10] sm:$0xf]
        %v1417 = vld [vmem:[%s8 + $0x14] sm:$0xf]
        %v1418 = vld [vmem:[%s8 + $0x18] sm:$0xf]
        %v1419 = vld [vmem:[%s8 + $0x1c] sm:$0xf]
        %v1420 = vperm.slane %v533, 6
        %v1429 = vunpack.c.l.b16 %v1412
        %v1430 = vunpack.c.l.b16 %v1413
        %v1431 = vunpack.c.l.b16 %v1414
        %v1432 = vunpack.c.l.b16 %v1415
        %v1433 = vunpack.c.l.b16 %v1416
        %v1434 = vunpack.c.l.b16 %v1417
        %v1435 = vunpack.c.l.b16 %v1418
        %v1436 = vunpack.c.l.b16 %v1419
        %v1437 = vpack.c.b16 %v1430, %v1429
        %v1438 = vpack.c.b16 %v1432, %v1431
        %v1439 = vpack.c.b16 %v1434, %v1433
        %v1440 = vpack.c.b16 %v1436, %v1435
        %vm1445 = vcmask 523264
        %v1447 = vsel %vm1445, %v1411, 0
        %1449 = vmatpush.bf16.msra.mxu0 0
        %1450 = vmatpush.bf16.msra.mxu0 0
        %1451 = vmatpush.bf16.msra.mxu0 0
        %1452 = vmatpush.bf16.msra.mxu0 0
        %1453 = vmatpush.bf16.msra.mxu0 %v1440
        %1454 = vmatpush.bf16.msra.mxu0 %v1439
        %1455 = vmatpush.bf16.msra.mxu0 %v1438
        %1456 = vmatpush.bf16.msra.mxu0 %v1437
        %1457 = vmatmul.bf16.gmra.mxu0 %v1447
        %v1458 = vpop.f32.mrf.mxu0
        %v1459 = vadd.f32 %v1420, %v1458
        %v1460 = vpop.f32.mrf.mxu0
        %1461 = vdwg.mxu0
        %v1462 = vadd.f32 %v1356, %v1459
        %v1463 = vsel %vm645, %v1462, 0.0
        %1464 = vadd.xlane.f32.xlu0 %v1463
        %v1465 = vpop.xlane.xlu0 %1464
        %v1466 = vmul.f32 %v1465, %v1333
        %v1467 = vsub.f32 %v1462, %v1466
        %v1468 = vmul.f32 %v1467, %v1467
        %v1469 = vsel %vm645, %v1468, 0.0
        %1470 = vadd.xlane.f32.xlu0 %v1469
        %v1471 = vpop.xlane.xlu0 %1470
        %v1472 = vmul.f32 %v1471, %v1333
        %v1473 = vadd.f32 %v1472, 1e-12
        %v1474 = vrsqrt.pop %v1473
        %v1475 = vmul.f32 %v1474, %v1473
        %v1476 = vmul.f32 %v1475, %v1474
        %v1477 = vmul.f32 0.5, %v1476
        %v1478 = vsub.f32 1.5, %v1477
        %v1479 = vmul.f32 %v1474, %v1478
        %vm1480 = vweird.f32 %v1473
        %vm1481 = vweird.f32 %v1474
        %vm1482 = vmor %vm1480, %vm1481
        %v1483 = vsel %vm1482, %v1474, %v1479
        %v1484 = vmul.f32 %v1467, %v1483
        %v1485 = vperm.slane %v533, 7
        %v1486 = vmul.f32 %v1484, %v1485
        %v1487 = vperm.slane %v534, 0
        %v1488 = vadd.f32 %v1486, %v1487
        %1489 = vst.msk [vmem:[%s527] sm:$0xff] %vm645, %v1488
        %s1490 = sand.u32 %s301, 1
        %s1491 = scalar_lea.sflag [#allocation6], %s1490
        %s1492 = sand.u32 %s301, 1
        %s1493 = smul.addr %s1492, 8
        %s1494 = scalar_lea.vmem [#allocation15], %s1493
        // Predicated region
        $region93: #{tpu_custom_call.1} parent=63 // pred_check
          %p1495 = pneg %p311
        $region94: #{tpu_custom_call.1} parent=63 // pred_check_branch
          %1497 = sbr.rel (%p1495) target = $region96
        $region95: #{tpu_custom_call.1} parent=63 // pred_region
          %1499 = vsyncadd %s1491, 0
          %s1500 = sadd.s32 %s38, %s37
          %s1501 = smul.addr %s1500, 8
          %s1502 = scalar_lea.hbm %s11, %s1501
          %s1504 = sshll.u32 %s1494, 4
          %s1505 = int_to_ptr.vmem [resolvable:$true] %s1504
          %s1506 = sshll.u32 %s1502, 4
          %s1507 = int_to_ptr.hbm [resolvable:$true] %s1506
          %1509 = dma.vmem_to_hbm [thread:$0]  %s1505, 128, %s1507, %s1491
        $region96: #{tpu_custom_call.1} parent=63 // pred_fallthru
          _
      $region64: #{tpu_custom_call.1} parent=5 // pred_fallthru
        _
      %p1510 = scmp.le.s32.totalorder 2, %s28
      // Predicated region
      $region97: #{tpu_custom_call.1} parent=5 // pred_check
        %p1511 = pneg %p1510
      $region98: #{tpu_custom_call.1} parent=5 // pred_check_branch
        %1513 = sbr.rel (%p1511) target = $region100
      $region99: #{tpu_custom_call.1} parent=5 // pred_region
        %s1514 = ssub.s32 %s28, 2
        // Predicated region
        $region101: #{tpu_custom_call.1} parent=99 // pred_check
          %p1515 = pneg %p317
        $region102: #{tpu_custom_call.1} parent=99 // pred_check_branch
          %1517 = sbr.rel (%p1515) target = $region104
        $region103: #{tpu_custom_call.1} parent=99 // pred_region
          %s1518 = sand.u32 %s302, 1
          %s1519 = scalar_lea.sflag [#allocation6], %s1518
          %s1520 = sand.u32 %s302, 1
          %s1521 = smul.addr %s1520, 8
          %s1522 = scalar_lea.vmem [#allocation15], %s1521
          %1524 = dma.done %s1519, 128
        $region104: #{tpu_custom_call.1} parent=99 // pred_fallthru
          _
      $region100: #{tpu_custom_call.1} parent=5 // pred_fallthru
        _
    $region6: #{tpu_custom_call.1} parent=1 // loop_footer
      %s32 = sadd.s32 1, %s28
    $region7: #{tpu_custom_call.1} parent=1 // loop_footer_branch
      %27 = sbr.rel target = $region3
    $region8: #{tpu_custom_call.1} parent=1 // loop_exit
      _
    %1525 = vsyncpa [#allocation5], 1
    %s1526 = scalar_lea.sflag [#allocation5], 1
    %1527 = vsyncpa %s1526, 1
    %1528 = vsyncpa [#allocation8], 1
    %s1529 = scalar_lea.sflag [#allocation8], 1
    %1530 = vsyncpa %s1529, 1
    %1531 = vsyncpa [#allocation11], 1
    %1532 = vsyncpa [#allocation14], 1
    %1533 = vsyncpa [#allocation6], 1
    %s1534 = scalar_lea.sflag [#allocation6], 1
    %1535 = vsyncpa %s1534, 1

</llo_original>
